<compile_context>
chip_gen: v7x
topology: tpu7x:2x2x1
jax: 0.10.0
libtpu: 0.0.40
codegen_flags: <defaults>
</compile_context>

<pallas_src>
import functools

import jax
import jax.numpy as jnp
from jax.experimental import pallas as pl
from jax.experimental.pallas import tpu as pltpu

KH = KW = 2   # both convs use 2x2 kernels
PAD = 2       # conv1 padding


def _fused_kernel(x_ref, w1_ref, b1_ref, w2_ref, b2_ref, out_ref, a1_ref, *,
                  Cin, Co1, Co2, Wp, PP):
    # x_ref : (Cin, PPE)        VMEM, zero-padded input (flattened) + zero tail
    # w1_ref: (Co1, Cin*KH*KW)  VMEM, OIHW-flattened conv1 weights
    # b1_ref: (Co1, 1)          VMEM
    # w2_ref: (Co2, Co1*KH*KW)  VMEM
    # b2_ref: (Co2, 1)          VMEM
    # out_ref:(Co2, PP)         VMEM, conv2 result on the padded grid
    # a1_ref: (Co1, PPE)        VMEM scratch: conv1 activation + zero tail
    PPE = a1_ref.shape[-1]

    # ---- conv1 (Cin->Co1, 2x2) + bias + ReLU: sublane-vectorized over Co1 ----
    acc1 = jnp.zeros((Co1, PP), jnp.float32)
    for ci in range(Cin):
        for kh in range(KH):
            for kw in range(KW):
                t = (ci * KH + kh) * KW + kw
                win = x_ref[ci, pl.ds(kh * Wp + kw, PP)]          # (PP,)
                acc1 = acc1 + w1_ref[:, pl.ds(t, 1)] * win[None, :]
    a1 = jnp.maximum(acc1 + b1_ref[...], 0.0)                     # (Co1, PP)
    a1_ref[:, pl.ds(0, PP)] = a1
    # Zero only the (Wp+1)-lane tail: conv2's shifted reads stay in bounds and
    # finite; the positions they feed are sliced away by the wrapper anyway.
    a1_ref[:, pl.ds(PP, PPE - PP)] = jnp.zeros((Co1, PPE - PP), jnp.float32)

    # ---- conv2 (Co1->Co2, 2x2) + bias + ReLU, then (x-3) and ReLU6 ----------
    acc2 = jnp.zeros((Co2, PP), jnp.float32)
    for ci in range(Co1):
        for kh in range(KH):
            for kw in range(KW):
                t = (ci * KH + kh) * KW + kw
                win = a1_ref[ci, pl.ds(kh * Wp + kw, PP)]         # (PP,)
                acc2 = acc2 + w2_ref[:, pl.ds(t, 1)] * win[None, :]
    a2 = jnp.maximum(acc2 + b2_ref[...], 0.0)
    out_ref[...] = jnp.clip(a2 - 3.0, 0.0, 6.0)


@jax.jit
def model_forward(x_nchw, w1_oihw, b1, w2_oihw, b2):
    """Forward pass of the PyTorch Model; input/output are NCHW float32."""
    N, Cin, H, W = x_nchw.shape
    Co1 = w1_oihw.shape[0]
    Co2 = w2_oihw.shape[0]
    Hp, Wp = H + 2 * PAD, W + 2 * PAD
    H1, W1 = Hp - KH + 1, Wp - KW + 1
    H2, W2 = H1 - KH + 1, W1 - KW + 1
    PP = Hp * Wp
    PPE = PP + (KH - 1) * Wp + (KW - 1)   # tail so shifted window reads stay in-bounds

    # Wrapper-side padding of a ~10 KB tensor (XLA fuses it): spatial PAD frame
    # plus a flat zero tail of (Wp+1) lanes.
    x = x_nchw.astype(jnp.float32)
    xp = jnp.pad(x, ((0, 0), (0, 0), (PAD, PAD), (PAD, PAD)))     # (N, Cin, Hp, Wp)
    xp = xp.reshape(N, Cin, PP)
    xp = jnp.pad(xp, ((0, 0), (0, 0), (0, PPE - PP)))             # (N, Cin, PPE)

    # Weights as (Co, taps) so per-tap columns are a trivial VMEM slice.
    w1_2d = w1_oihw.reshape(Co1, Cin * KH * KW).astype(jnp.float32)
    w2_2d = w2_oihw.reshape(Co2, Co1 * KH * KW).astype(jnp.float32)
    b1_2d = b1.reshape(Co1, 1).astype(jnp.float32)
    b2_2d = b2.reshape(Co2, 1).astype(jnp.float32)

    kernel = functools.partial(
        _fused_kernel, Cin=Cin, Co1=Co1, Co2=Co2, Wp=Wp, PP=PP)

    flops = N * (2 * H1 * W1 * Cin * KH * KW * Co1 +
                 2 * H2 * W2 * Co1 * KH * KW * Co2)
    bytes_accessed = 4 * (N * Cin * PPE + N * Co2 * PP +
                          w1_2d.size + w2_2d.size + b1_2d.size + b2_2d.size)

    out_flat = pl.pallas_call(
        kernel,
        out_shape=jax.ShapeDtypeStruct((N, Co2, PP), jnp.float32),
        grid=(N,),
        in_specs=[
            pl.BlockSpec((None, Cin, PPE), lambda n: (n, 0, 0)),
            pl.BlockSpec((Co1, Cin * KH * KW), lambda n: (0, 0)),
            pl.BlockSpec((Co1, 1), lambda n: (0, 0)),
            pl.BlockSpec((Co2, Co1 * KH * KW), lambda n: (0, 0)),
            pl.BlockSpec((Co2, 1), lambda n: (0, 0)),
        ],
        out_specs=pl.BlockSpec((None, Co2, PP), lambda n: (n, 0, 0)),
        scratch_shapes=[
            pltpu.VMEM((Co1, PPE), jnp.float32),   # conv1 activation + tail
        ],
        cost_estimate=pl.CostEstimate(
            flops=flops, transcendentals=0, bytes_accessed=bytes_accessed),
        # One batch sample per grid step; "parallel" lets v7x's two
        # TensorCores split the batch (harmless ~0.35us/step on v5e/v6e).
        compiler_params=pltpu.CompilerParams(
            dimension_semantics=("parallel",)),
    )(xp, w1_2d, b1_2d, w2_2d, b2_2d)

    # Keep only the valid (H2, W2) window of the padded grid; output is NCHW.
    return out_flat.reshape(N, Co2, Hp, Wp)[:, :, :H2, :W2]


def _reference(x_nchw, w1, b1, w2, b2):
    """Pure-JAX reference using lax.conv (matches PyTorch semantics)."""
    a1 = jax.lax.conv_general_dilated(
        x_nchw, w1, window_strides=(1, 1), padding=[(PAD, PAD), (PAD, PAD)],
        dimension_numbers=("NCHW", "OIHW", "NCHW")) + b1.reshape(1, -1, 1, 1)
    a1 = jnp.maximum(a1, 0.0)
    a2 = jax.lax.conv_general_dilated(
        a1, w2, window_strides=(1, 1), padding=[(0, 0), (0, 0)],
        dimension_numbers=("NCHW", "OIHW", "NCHW")) + b2.reshape(1, -1, 1, 1)
    a2 = jnp.maximum(a2, 0.0)
    return jnp.clip(a2 - 3.0, 0.0, 6.0)


if __name__ == "__main__":
    key = jax.random.PRNGKey(0)
    k_x, k_w1, k_b1, k_w2, k_b2 = jax.random.split(key, 5)

    # Small shapes consistent with the module: NCHW input, Cin=5.
    N, Cin, H, W = 2, 5, 16, 16
    Co1, Co2 = 7, 9

    x = jax.random.normal(k_x, (N, Cin, H, W), dtype=jnp.float32)

    # Deterministic PyTorch-like init: U(-1/sqrt(fan_in), 1/sqrt(fan_in)).
    fan1 = Cin * KH * KW
    fan2 = Co1 * KH * KW
    w1 = jax.random.uniform(k_w1, (Co1, Cin, KH, KW), jnp.float32,
                            -1.0 / jnp.sqrt(fan1), 1.0 / jnp.sqrt(fan1))
    b1 = jax.random.uniform(k_b1, (Co1,), jnp.float32,
                            -1.0 / jnp.sqrt(fan1), 1.0 / jnp.sqrt(fan1))
    w2 = jax.random.uniform(k_w2, (Co2, Co1, KH, KW), jnp.float32,
                            -1.0 / jnp.sqrt(fan2), 1.0 / jnp.sqrt(fan2))
    b2 = jax.random.uniform(k_b2, (Co2,), jnp.float32,
                            -1.0 / jnp.sqrt(fan2), 1.0 / jnp.sqrt(fan2))

    out = jax.block_until_ready(model_forward(x, w1, b1, w2, b2))
    ref = jax.block_until_ready(_reference(x, w1, b1, w2, b2))

    H2 = H + 2 * PAD - (KH - 1) - (KH - 1)
    assert out.shape == ref.shape == (N, Co2, H2, H2)
    assert jnp.allclose(out, ref, atol=1e-5, rtol=1e-5), "mismatch vs reference"

    print("KERNEL_OK")
</pallas_src>

<mosaic_0001>
module attributes {stable_mosaic.version = 11 : i64} {
  func.func @_fused_kernel(%arg0: i32, %arg1: memref<1x5x421xf32, #tpu.memory_space<vmem>>, %arg2: memref<7x20xf32, #tpu.memory_space<vmem>>, %arg3: memref<7x1xf32, #tpu.memory_space<vmem>>, %arg4: memref<9x28xf32, #tpu.memory_space<vmem>>, %arg5: memref<9x1xf32, #tpu.memory_space<vmem>>, %arg6: memref<1x9x400xf32, #tpu.memory_space<vmem>>, %arg7: memref<7x421xf32, #tpu.memory_space<vmem>>) attributes {dimension_semantics = [#tpu.dimension_semantics<parallel>], iteration_bounds = array<i64: 2>, scalar_prefetch = 0 : i64, scratch_operands = 1 : i64, tpu.core_type = #tpu.core_type<tc>, window_params = [{transform_indices = @transform_0, window_bounds = array<i64: 1, 5, 421>}, {pipeline_mode = #tpu.pipeline_mode<synchronous>, transform_indices = @transform_1, window_bounds = array<i64: 7, 20>}, {pipeline_mode = #tpu.pipeline_mode<synchronous>, transform_indices = @transform_2, window_bounds = array<i64: 7, 1>}, {pipeline_mode = #tpu.pipeline_mode<synchronous>, transform_indices = @transform_3, window_bounds = array<i64: 9, 28>}, {pipeline_mode = #tpu.pipeline_mode<synchronous>, transform_indices = @transform_4, window_bounds = array<i64: 9, 1>}, {transform_indices = @transform_5, window_bounds = array<i64: 1, 9, 400>}]} {
    %cst = arith.constant 0.000000e+00 : f32
    %0 = vector.broadcast %cst : f32 to vector<7x400xf32>
    %c0 = arith.constant 0 : index
    %c0_0 = arith.constant 0 : index
    %c0_1 = arith.constant 0 : index
    %1 = vector.load %arg1[%c0, %c0_0, %c0_1] : memref<1x5x421xf32, #tpu.memory_space<vmem>>, vector<1x1x400xf32>
    %2 = vector.shape_cast %1 : vector<1x1x400xf32> to vector<400xf32>
    %c0_2 = arith.constant 0 : index
    %c0_3 = arith.constant 0 : index
    %3 = vector.load %arg2[%c0_2, %c0_3] : memref<7x20xf32, #tpu.memory_space<vmem>>, vector<7x1xf32>
    %4 = vector.shape_cast %2 : vector<400xf32> to vector<1x400xf32>
    %5 = vector.broadcast %3 : vector<7x1xf32> to vector<7x400xf32>
    %6 = vector.broadcast %4 : vector<1x400xf32> to vector<7x400xf32>
    %7 = arith.mulf %5, %6 : vector<7x400xf32>
    %8 = arith.addf %0, %7 : vector<7x400xf32>
    %c0_4 = arith.constant 0 : index
    %c0_5 = arith.constant 0 : index
    %c1 = arith.constant 1 : index
    %9 = vector.load %arg1[%c0_4, %c0_5, %c1] : memref<1x5x421xf32, #tpu.memory_space<vmem>>, vector<1x1x400xf32>
    %10 = vector.shape_cast %9 : vector<1x1x400xf32> to vector<400xf32>
    %c0_6 = arith.constant 0 : index
    %c1_7 = arith.constant 1 : index
    %11 = vector.load %arg2[%c0_6, %c1_7] : memref<7x20xf32, #tpu.memory_space<vmem>>, vector<7x1xf32>
    %12 = vector.shape_cast %10 : vector<400xf32> to vector<1x400xf32>
    %13 = vector.broadcast %11 : vector<7x1xf32> to vector<7x400xf32>
    %14 = vector.broadcast %12 : vector<1x400xf32> to vector<7x400xf32>
    %15 = arith.mulf %13, %14 : vector<7x400xf32>
    %16 = arith.addf %8, %15 : vector<7x400xf32>
    %c0_8 = arith.constant 0 : index
    %c0_9 = arith.constant 0 : index
    %c20 = arith.constant 20 : index
    %17 = vector.load %arg1[%c0_8, %c0_9, %c20] : memref<1x5x421xf32, #tpu.memory_space<vmem>>, vector<1x1x400xf32>
    %18 = vector.shape_cast %17 : vector<1x1x400xf32> to vector<400xf32>
    %c0_10 = arith.constant 0 : index
    %c2 = arith.constant 2 : index
    %19 = vector.load %arg2[%c0_10, %c2] : memref<7x20xf32, #tpu.memory_space<vmem>>, vector<7x1xf32>
    %20 = vector.shape_cast %18 : vector<400xf32> to vector<1x400xf32>
    %21 = vector.broadcast %19 : vector<7x1xf32> to vector<7x400xf32>
    %22 = vector.broadcast %20 : vector<1x400xf32> to vector<7x400xf32>
    %23 = arith.mulf %21, %22 : vector<7x400xf32>
    %24 = arith.addf %16, %23 : vector<7x400xf32>
    %c0_11 = arith.constant 0 : index
    %c0_12 = arith.constant 0 : index
    %c21 = arith.constant 21 : index
    %25 = vector.load %arg1[%c0_11, %c0_12, %c21] : memref<1x5x421xf32, #tpu.memory_space<vmem>>, vector<1x1x400xf32>
    %26 = vector.shape_cast %25 : vector<1x1x400xf32> to vector<400xf32>
    %c0_13 = arith.constant 0 : index
    %c3 = arith.constant 3 : index
    %27 = vector.load %arg2[%c0_13, %c3] : memref<7x20xf32, #tpu.memory_space<vmem>>, vector<7x1xf32>
    %28 = vector.shape_cast %26 : vector<400xf32> to vector<1x400xf32>
    %29 = vector.broadcast %27 : vector<7x1xf32> to vector<7x400xf32>
    %30 = vector.broadcast %28 : vector<1x400xf32> to vector<7x400xf32>
    %31 = arith.mulf %29, %30 : vector<7x400xf32>
    %32 = arith.addf %24, %31 : vector<7x400xf32>
    %c0_14 = arith.constant 0 : index
    %c1_15 = arith.constant 1 : index
    %c0_16 = arith.constant 0 : index
    %33 = vector.load %arg1[%c0_14, %c1_15, %c0_16] : memref<1x5x421xf32, #tpu.memory_space<vmem>>, vector<1x1x400xf32>
    %34 = vector.shape_cast %33 : vector<1x1x400xf32> to vector<400xf32>
    %c0_17 = arith.constant 0 : index
    %c4 = arith.constant 4 : index
    %35 = vector.load %arg2[%c0_17, %c4] : memref<7x20xf32, #tpu.memory_space<vmem>>, vector<7x1xf32>
    %36 = vector.shape_cast %34 : vector<400xf32> to vector<1x400xf32>
    %37 = vector.broadcast %35 : vector<7x1xf32> to vector<7x400xf32>
    %38 = vector.broadcast %36 : vector<1x400xf32> to vector<7x400xf32>
    %39 = arith.mulf %37, %38 : vector<7x400xf32>
    %40 = arith.addf %32, %39 : vector<7x400xf32>
    %c0_18 = arith.constant 0 : index
    %c1_19 = arith.constant 1 : index
    %c1_20 = arith.constant 1 : index
    %41 = vector.load %arg1[%c0_18, %c1_19, %c1_20] : memref<1x5x421xf32, #tpu.memory_space<vmem>>, vector<1x1x400xf32>
    %42 = vector.shape_cast %41 : vector<1x1x400xf32> to vector<400xf32>
    %c0_21 = arith.constant 0 : index
    %c5 = arith.constant 5 : index
    %43 = vector.load %arg2[%c0_21, %c5] : memref<7x20xf32, #tpu.memory_space<vmem>>, vector<7x1xf32>
    %44 = vector.shape_cast %42 : vector<400xf32> to vector<1x400xf32>
    %45 = vector.broadcast %43 : vector<7x1xf32> to vector<7x400xf32>
    %46 = vector.broadcast %44 : vector<1x400xf32> to vector<7x400xf32>
    %47 = arith.mulf %45, %46 : vector<7x400xf32>
    %48 = arith.addf %40, %47 : vector<7x400xf32>
    %c0_22 = arith.constant 0 : index
    %c1_23 = arith.constant 1 : index
    %c20_24 = arith.constant 20 : index
    %49 = vector.load %arg1[%c0_22, %c1_23, %c20_24] : memref<1x5x421xf32, #tpu.memory_space<vmem>>, vector<1x1x400xf32>
    %50 = vector.shape_cast %49 : vector<1x1x400xf32> to vector<400xf32>
    %c0_25 = arith.constant 0 : index
    %c6 = arith.constant 6 : index
    %51 = vector.load %arg2[%c0_25, %c6] : memref<7x20xf32, #tpu.memory_space<vmem>>, vector<7x1xf32>
    %52 = vector.shape_cast %50 : vector<400xf32> to vector<1x400xf32>
    %53 = vector.broadcast %51 : vector<7x1xf32> to vector<7x400xf32>
    %54 = vector.broadcast %52 : vector<1x400xf32> to vector<7x400xf32>
    %55 = arith.mulf %53, %54 : vector<7x400xf32>
    %56 = arith.addf %48, %55 : vector<7x400xf32>
    %c0_26 = arith.constant 0 : index
    %c1_27 = arith.constant 1 : index
    %c21_28 = arith.constant 21 : index
    %57 = vector.load %arg1[%c0_26, %c1_27, %c21_28] : memref<1x5x421xf32, #tpu.memory_space<vmem>>, vector<1x1x400xf32>
    %58 = vector.shape_cast %57 : vector<1x1x400xf32> to vector<400xf32>
    %c0_29 = arith.constant 0 : index
    %c7 = arith.constant 7 : index
    %59 = vector.load %arg2[%c0_29, %c7] : memref<7x20xf32, #tpu.memory_space<vmem>>, vector<7x1xf32>
    %60 = vector.shape_cast %58 : vector<400xf32> to vector<1x400xf32>
    %61 = vector.broadcast %59 : vector<7x1xf32> to vector<7x400xf32>
    %62 = vector.broadcast %60 : vector<1x400xf32> to vector<7x400xf32>
    %63 = arith.mulf %61, %62 : vector<7x400xf32>
    %64 = arith.addf %56, %63 : vector<7x400xf32>
    %c0_30 = arith.constant 0 : index
    %c2_31 = arith.constant 2 : index
    %c0_32 = arith.constant 0 : index
    %65 = vector.load %arg1[%c0_30, %c2_31, %c0_32] : memref<1x5x421xf32, #tpu.memory_space<vmem>>, vector<1x1x400xf32>
    %66 = vector.shape_cast %65 : vector<1x1x400xf32> to vector<400xf32>
    %c0_33 = arith.constant 0 : index
    %c8 = arith.constant 8 : index
    %67 = vector.load %arg2[%c0_33, %c8] : memref<7x20xf32, #tpu.memory_space<vmem>>, vector<7x1xf32>
    %68 = vector.shape_cast %66 : vector<400xf32> to vector<1x400xf32>
    %69 = vector.broadcast %67 : vector<7x1xf32> to vector<7x400xf32>
    %70 = vector.broadcast %68 : vector<1x400xf32> to vector<7x400xf32>
    %71 = arith.mulf %69, %70 : vector<7x400xf32>
    %72 = arith.addf %64, %71 : vector<7x400xf32>
    %c0_34 = arith.constant 0 : index
    %c2_35 = arith.constant 2 : index
    %c1_36 = arith.constant 1 : index
    %73 = vector.load %arg1[%c0_34, %c2_35, %c1_36] : memref<1x5x421xf32, #tpu.memory_space<vmem>>, vector<1x1x400xf32>
    %74 = vector.shape_cast %73 : vector<1x1x400xf32> to vector<400xf32>
    %c0_37 = arith.constant 0 : index
    %c9 = arith.constant 9 : index
    %75 = vector.load %arg2[%c0_37, %c9] : memref<7x20xf32, #tpu.memory_space<vmem>>, vector<7x1xf32>
    %76 = vector.shape_cast %74 : vector<400xf32> to vector<1x400xf32>
    %77 = vector.broadcast %75 : vector<7x1xf32> to vector<7x400xf32>
    %78 = vector.broadcast %76 : vector<1x400xf32> to vector<7x400xf32>
    %79 = arith.mulf %77, %78 : vector<7x400xf32>
    %80 = arith.addf %72, %79 : vector<7x400xf32>
    %c0_38 = arith.constant 0 : index
    %c2_39 = arith.constant 2 : index
    %c20_40 = arith.constant 20 : index
    %81 = vector.load %arg1[%c0_38, %c2_39, %c20_40] : memref<1x5x421xf32, #tpu.memory_space<vmem>>, vector<1x1x400xf32>
    %82 = vector.shape_cast %81 : vector<1x1x400xf32> to vector<400xf32>
    %c0_41 = arith.constant 0 : index
    %c10 = arith.constant 10 : index
    %83 = vector.load %arg2[%c0_41, %c10] : memref<7x20xf32, #tpu.memory_space<vmem>>, vector<7x1xf32>
    %84 = vector.shape_cast %82 : vector<400xf32> to vector<1x400xf32>
    %85 = vector.broadcast %83 : vector<7x1xf32> to vector<7x400xf32>
    %86 = vector.broadcast %84 : vector<1x400xf32> to vector<7x400xf32>
    %87 = arith.mulf %85, %86 : vector<7x400xf32>
    %88 = arith.addf %80, %87 : vector<7x400xf32>
    %c0_42 = arith.constant 0 : index
    %c2_43 = arith.constant 2 : index
    %c21_44 = arith.constant 21 : index
    %89 = vector.load %arg1[%c0_42, %c2_43, %c21_44] : memref<1x5x421xf32, #tpu.memory_space<vmem>>, vector<1x1x400xf32>
    %90 = vector.shape_cast %89 : vector<1x1x400xf32> to vector<400xf32>
    %c0_45 = arith.constant 0 : index
    %c11 = arith.constant 11 : index
    %91 = vector.load %arg2[%c0_45, %c11] : memref<7x20xf32, #tpu.memory_space<vmem>>, vector<7x1xf32>
    %92 = vector.shape_cast %90 : vector<400xf32> to vector<1x400xf32>
    %93 = vector.broadcast %91 : vector<7x1xf32> to vector<7x400xf32>
    %94 = vector.broadcast %92 : vector<1x400xf32> to vector<7x400xf32>
    %95 = arith.mulf %93, %94 : vector<7x400xf32>
    %96 = arith.addf %88, %95 : vector<7x400xf32>
    %c0_46 = arith.constant 0 : index
    %c3_47 = arith.constant 3 : index
    %c0_48 = arith.constant 0 : index
    %97 = vector.load %arg1[%c0_46, %c3_47, %c0_48] : memref<1x5x421xf32, #tpu.memory_space<vmem>>, vector<1x1x400xf32>
    %98 = vector.shape_cast %97 : vector<1x1x400xf32> to vector<400xf32>
    %c0_49 = arith.constant 0 : index
    %c12 = arith.constant 12 : index
    %99 = vector.load %arg2[%c0_49, %c12] : memref<7x20xf32, #tpu.memory_space<vmem>>, vector<7x1xf32>
    %100 = vector.shape_cast %98 : vector<400xf32> to vector<1x400xf32>
    %101 = vector.broadcast %99 : vector<7x1xf32> to vector<7x400xf32>
    %102 = vector.broadcast %100 : vector<1x400xf32> to vector<7x400xf32>
    %103 = arith.mulf %101, %102 : vector<7x400xf32>
    %104 = arith.addf %96, %103 : vector<7x400xf32>
    %c0_50 = arith.constant 0 : index
    %c3_51 = arith.constant 3 : index
    %c1_52 = arith.constant 1 : index
    %105 = vector.load %arg1[%c0_50, %c3_51, %c1_52] : memref<1x5x421xf32, #tpu.memory_space<vmem>>, vector<1x1x400xf32>
    %106 = vector.shape_cast %105 : vector<1x1x400xf32> to vector<400xf32>
    %c0_53 = arith.constant 0 : index
    %c13 = arith.constant 13 : index
    %107 = vector.load %arg2[%c0_53, %c13] : memref<7x20xf32, #tpu.memory_space<vmem>>, vector<7x1xf32>
    %108 = vector.shape_cast %106 : vector<400xf32> to vector<1x400xf32>
    %109 = vector.broadcast %107 : vector<7x1xf32> to vector<7x400xf32>
    %110 = vector.broadcast %108 : vector<1x400xf32> to vector<7x400xf32>
    %111 = arith.mulf %109, %110 : vector<7x400xf32>
    %112 = arith.addf %104, %111 : vector<7x400xf32>
    %c0_54 = arith.constant 0 : index
    %c3_55 = arith.constant 3 : index
    %c20_56 = arith.constant 20 : index
    %113 = vector.load %arg1[%c0_54, %c3_55, %c20_56] : memref<1x5x421xf32, #tpu.memory_space<vmem>>, vector<1x1x400xf32>
    %114 = vector.shape_cast %113 : vector<1x1x400xf32> to vector<400xf32>
    %c0_57 = arith.constant 0 : index
    %c14 = arith.constant 14 : index
    %115 = vector.load %arg2[%c0_57, %c14] : memref<7x20xf32, #tpu.memory_space<vmem>>, vector<7x1xf32>
    %116 = vector.shape_cast %114 : vector<400xf32> to vector<1x400xf32>
    %117 = vector.broadcast %115 : vector<7x1xf32> to vector<7x400xf32>
    %118 = vector.broadcast %116 : vector<1x400xf32> to vector<7x400xf32>
    %119 = arith.mulf %117, %118 : vector<7x400xf32>
    %120 = arith.addf %112, %119 : vector<7x400xf32>
    %c0_58 = arith.constant 0 : index
    %c3_59 = arith.constant 3 : index
    %c21_60 = arith.constant 21 : index
    %121 = vector.load %arg1[%c0_58, %c3_59, %c21_60] : memref<1x5x421xf32, #tpu.memory_space<vmem>>, vector<1x1x400xf32>
    %122 = vector.shape_cast %121 : vector<1x1x400xf32> to vector<400xf32>
    %c0_61 = arith.constant 0 : index
    %c15 = arith.constant 15 : index
    %123 = vector.load %arg2[%c0_61, %c15] : memref<7x20xf32, #tpu.memory_space<vmem>>, vector<7x1xf32>
    %124 = vector.shape_cast %122 : vector<400xf32> to vector<1x400xf32>
    %125 = vector.broadcast %123 : vector<7x1xf32> to vector<7x400xf32>
    %126 = vector.broadcast %124 : vector<1x400xf32> to vector<7x400xf32>
    %127 = arith.mulf %125, %126 : vector<7x400xf32>
    %128 = arith.addf %120, %127 : vector<7x400xf32>
    %c0_62 = arith.constant 0 : index
    %c4_63 = arith.constant 4 : index
    %c0_64 = arith.constant 0 : index
    %129 = vector.load %arg1[%c0_62, %c4_63, %c0_64] : memref<1x5x421xf32, #tpu.memory_space<vmem>>, vector<1x1x400xf32>
    %130 = vector.shape_cast %129 : vector<1x1x400xf32> to vector<400xf32>
    %c0_65 = arith.constant 0 : index
    %c16 = arith.constant 16 : index
    %131 = vector.load %arg2[%c0_65, %c16] : memref<7x20xf32, #tpu.memory_space<vmem>>, vector<7x1xf32>
    %132 = vector.shape_cast %130 : vector<400xf32> to vector<1x400xf32>
    %133 = vector.broadcast %131 : vector<7x1xf32> to vector<7x400xf32>
    %134 = vector.broadcast %132 : vector<1x400xf32> to vector<7x400xf32>
    %135 = arith.mulf %133, %134 : vector<7x400xf32>
    %136 = arith.addf %128, %135 : vector<7x400xf32>
    %c0_66 = arith.constant 0 : index
    %c4_67 = arith.constant 4 : index
    %c1_68 = arith.constant 1 : index
    %137 = vector.load %arg1[%c0_66, %c4_67, %c1_68] : memref<1x5x421xf32, #tpu.memory_space<vmem>>, vector<1x1x400xf32>
    %138 = vector.shape_cast %137 : vector<1x1x400xf32> to vector<400xf32>
    %c0_69 = arith.constant 0 : index
    %c17 = arith.constant 17 : index
    %139 = vector.load %arg2[%c0_69, %c17] : memref<7x20xf32, #tpu.memory_space<vmem>>, vector<7x1xf32>
    %140 = vector.shape_cast %138 : vector<400xf32> to vector<1x400xf32>
    %141 = vector.broadcast %139 : vector<7x1xf32> to vector<7x400xf32>
    %142 = vector.broadcast %140 : vector<1x400xf32> to vector<7x400xf32>
    %143 = arith.mulf %141, %142 : vector<7x400xf32>
    %144 = arith.addf %136, %143 : vector<7x400xf32>
    %c0_70 = arith.constant 0 : index
    %c4_71 = arith.constant 4 : index
    %c20_72 = arith.constant 20 : index
    %145 = vector.load %arg1[%c0_70, %c4_71, %c20_72] : memref<1x5x421xf32, #tpu.memory_space<vmem>>, vector<1x1x400xf32>
    %146 = vector.shape_cast %145 : vector<1x1x400xf32> to vector<400xf32>
    %c0_73 = arith.constant 0 : index
    %c18 = arith.constant 18 : index
    %147 = vector.load %arg2[%c0_73, %c18] : memref<7x20xf32, #tpu.memory_space<vmem>>, vector<7x1xf32>
    %148 = vector.shape_cast %146 : vector<400xf32> to vector<1x400xf32>
    %149 = vector.broadcast %147 : vector<7x1xf32> to vector<7x400xf32>
    %150 = vector.broadcast %148 : vector<1x400xf32> to vector<7x400xf32>
    %151 = arith.mulf %149, %150 : vector<7x400xf32>
    %152 = arith.addf %144, %151 : vector<7x400xf32>
    %c0_74 = arith.constant 0 : index
    %c4_75 = arith.constant 4 : index
    %c21_76 = arith.constant 21 : index
    %153 = vector.load %arg1[%c0_74, %c4_75, %c21_76] : memref<1x5x421xf32, #tpu.memory_space<vmem>>, vector<1x1x400xf32>
    %154 = vector.shape_cast %153 : vector<1x1x400xf32> to vector<400xf32>
    %c0_77 = arith.constant 0 : index
    %c19 = arith.constant 19 : index
    %155 = vector.load %arg2[%c0_77, %c19] : memref<7x20xf32, #tpu.memory_space<vmem>>, vector<7x1xf32>
    %156 = vector.shape_cast %154 : vector<400xf32> to vector<1x400xf32>
    %157 = vector.broadcast %155 : vector<7x1xf32> to vector<7x400xf32>
    %158 = vector.broadcast %156 : vector<1x400xf32> to vector<7x400xf32>
    %159 = arith.mulf %157, %158 : vector<7x400xf32>
    %160 = arith.addf %152, %159 : vector<7x400xf32>
    %c0_78 = arith.constant 0 : index
    %c0_79 = arith.constant 0 : index
    %161 = vector.load %arg3[%c0_78, %c0_79] : memref<7x1xf32, #tpu.memory_space<vmem>>, vector<7x1xf32>
    %162 = vector.broadcast %161 : vector<7x1xf32> to vector<7x400xf32>
    %163 = arith.addf %160, %162 : vector<7x400xf32>
    %cst_80 = arith.constant 0.000000e+00 : f32
    %164 = vector.broadcast %cst_80 : f32 to vector<7x400xf32>
    %165 = arith.maximumf %163, %164 : vector<7x400xf32>
    %c0_81 = arith.constant 0 : index
    %c0_82 = arith.constant 0 : index
    %166 = vector.load %arg7[%c0_81, %c0_82] : memref<7x421xf32, #tpu.memory_space<vmem>>, vector<7x400xf32>
    tpu.vector_store %arg7[%c0_81, %c0_82], %165 {strides = array<i32>} : memref<7x421xf32, #tpu.memory_space<vmem>>, vector<7x400xf32>,
    %cst_83 = arith.constant 0.000000e+00 : f32
    %167 = vector.broadcast %cst_83 : f32 to vector<7x21xf32>
    %c0_84 = arith.constant 0 : index
    %c400 = arith.constant 400 : index
    %168 = vector.load %arg7[%c0_84, %c400] : memref<7x421xf32, #tpu.memory_space<vmem>>, vector<7x21xf32>
    tpu.vector_store %arg7[%c0_84, %c400], %167 {strides = array<i32>} : memref<7x421xf32, #tpu.memory_space<vmem>>, vector<7x21xf32>,
    %cst_85 = arith.constant 0.000000e+00 : f32
    %169 = vector.broadcast %cst_85 : f32 to vector<9x400xf32>
    %c0_86 = arith.constant 0 : index
    %c0_87 = arith.constant 0 : index
    %170 = vector.load %arg7[%c0_86, %c0_87] : memref<7x421xf32, #tpu.memory_space<vmem>>, vector<1x400xf32>
    %171 = vector.shape_cast %170 : vector<1x400xf32> to vector<400xf32>
    %c0_88 = arith.constant 0 : index
    %c0_89 = arith.constant 0 : index
    %172 = vector.load %arg4[%c0_88, %c0_89] : memref<9x28xf32, #tpu.memory_space<vmem>>, vector<9x1xf32>
    %173 = vector.shape_cast %171 : vector<400xf32> to vector<1x400xf32>
    %174 = vector.broadcast %172 : vector<9x1xf32> to vector<9x400xf32>
    %175 = vector.broadcast %173 : vector<1x400xf32> to vector<9x400xf32>
    %176 = arith.mulf %174, %175 : vector<9x400xf32>
    %177 = arith.addf %169, %176 : vector<9x400xf32>
    %c0_90 = arith.constant 0 : index
    %c1_91 = arith.constant 1 : index
    %178 = vector.load %arg7[%c0_90, %c1_91] : memref<7x421xf32, #tpu.memory_space<vmem>>, vector<1x400xf32>
    %179 = vector.shape_cast %178 : vector<1x400xf32> to vector<400xf32>
    %c0_92 = arith.constant 0 : index
    %c1_93 = arith.constant 1 : index
    %180 = vector.load %arg4[%c0_92, %c1_93] : memref<9x28xf32, #tpu.memory_space<vmem>>, vector<9x1xf32>
    %181 = vector.shape_cast %179 : vector<400xf32> to vector<1x400xf32>
    %182 = vector.broadcast %180 : vector<9x1xf32> to vector<9x400xf32>
    %183 = vector.broadcast %181 : vector<1x400xf32> to vector<9x400xf32>
    %184 = arith.mulf %182, %183 : vector<9x400xf32>
    %185 = arith.addf %177, %184 : vector<9x400xf32>
    %c0_94 = arith.constant 0 : index
    %c20_95 = arith.constant 20 : index
    %186 = vector.load %arg7[%c0_94, %c20_95] : memref<7x421xf32, #tpu.memory_space<vmem>>, vector<1x400xf32>
    %187 = vector.shape_cast %186 : vector<1x400xf32> to vector<400xf32>
    %c0_96 = arith.constant 0 : index
    %c2_97 = arith.constant 2 : index
    %188 = vector.load %arg4[%c0_96, %c2_97] : memref<9x28xf32, #tpu.memory_space<vmem>>, vector<9x1xf32>
    %189 = vector.shape_cast %187 : vector<400xf32> to vector<1x400xf32>
    %190 = vector.broadcast %188 : vector<9x1xf32> to vector<9x400xf32>
    %191 = vector.broadcast %189 : vector<1x400xf32> to vector<9x400xf32>
    %192 = arith.mulf %190, %191 : vector<9x400xf32>
    %193 = arith.addf %185, %192 : vector<9x400xf32>
    %c0_98 = arith.constant 0 : index
    %c21_99 = arith.constant 21 : index
    %194 = vector.load %arg7[%c0_98, %c21_99] : memref<7x421xf32, #tpu.memory_space<vmem>>, vector<1x400xf32>
    %195 = vector.shape_cast %194 : vector<1x400xf32> to vector<400xf32>
    %c0_100 = arith.constant 0 : index
    %c3_101 = arith.constant 3 : index
    %196 = vector.load %arg4[%c0_100, %c3_101] : memref<9x28xf32, #tpu.memory_space<vmem>>, vector<9x1xf32>
    %197 = vector.shape_cast %195 : vector<400xf32> to vector<1x400xf32>
    %198 = vector.broadcast %196 : vector<9x1xf32> to vector<9x400xf32>
    %199 = vector.broadcast %197 : vector<1x400xf32> to vector<9x400xf32>
    %200 = arith.mulf %198, %199 : vector<9x400xf32>
    %201 = arith.addf %193, %200 : vector<9x400xf32>
    %c1_102 = arith.constant 1 : index
    %c0_103 = arith.constant 0 : index
    %202 = vector.load %arg7[%c1_102, %c0_103] : memref<7x421xf32, #tpu.memory_space<vmem>>, vector<1x400xf32>
    %203 = vector.shape_cast %202 : vector<1x400xf32> to vector<400xf32>
    %c0_104 = arith.constant 0 : index
    %c4_105 = arith.constant 4 : index
    %204 = vector.load %arg4[%c0_104, %c4_105] : memref<9x28xf32, #tpu.memory_space<vmem>>, vector<9x1xf32>
    %205 = vector.shape_cast %203 : vector<400xf32> to vector<1x400xf32>
    %206 = vector.broadcast %204 : vector<9x1xf32> to vector<9x400xf32>
    %207 = vector.broadcast %205 : vector<1x400xf32> to vector<9x400xf32>
    %208 = arith.mulf %206, %207 : vector<9x400xf32>
    %209 = arith.addf %201, %208 : vector<9x400xf32>
    %c1_106 = arith.constant 1 : index
    %c1_107 = arith.constant 1 : index
    %210 = vector.load %arg7[%c1_106, %c1_107] : memref<7x421xf32, #tpu.memory_space<vmem>>, vector<1x400xf32>
    %211 = vector.shape_cast %210 : vector<1x400xf32> to vector<400xf32>
    %c0_108 = arith.constant 0 : index
    %c5_109 = arith.constant 5 : index
    %212 = vector.load %arg4[%c0_108, %c5_109] : memref<9x28xf32, #tpu.memory_space<vmem>>, vector<9x1xf32>
    %213 = vector.shape_cast %211 : vector<400xf32> to vector<1x400xf32>
    %214 = vector.broadcast %212 : vector<9x1xf32> to vector<9x400xf32>
    %215 = vector.broadcast %213 : vector<1x400xf32> to vector<9x400xf32>
    %216 = arith.mulf %214, %215 : vector<9x400xf32>
    %217 = arith.addf %209, %216 : vector<9x400xf32>
    %c1_110 = arith.constant 1 : index
    %c20_111 = arith.constant 20 : index
    %218 = vector.load %arg7[%c1_110, %c20_111] : memref<7x421xf32, #tpu.memory_space<vmem>>, vector<1x400xf32>
    %219 = vector.shape_cast %218 : vector<1x400xf32> to vector<400xf32>
    %c0_112 = arith.constant 0 : index
    %c6_113 = arith.constant 6 : index
    %220 = vector.load %arg4[%c0_112, %c6_113] : memref<9x28xf32, #tpu.memory_space<vmem>>, vector<9x1xf32>
    %221 = vector.shape_cast %219 : vector<400xf32> to vector<1x400xf32>
    %222 = vector.broadcast %220 : vector<9x1xf32> to vector<9x400xf32>
    %223 = vector.broadcast %221 : vector<1x400xf32> to vector<9x400xf32>
    %224 = arith.mulf %222, %223 : vector<9x400xf32>
    %225 = arith.addf %217, %224 : vector<9x400xf32>
    %c1_114 = arith.constant 1 : index
    %c21_115 = arith.constant 21 : index
    %226 = vector.load %arg7[%c1_114, %c21_115] : memref<7x421xf32, #tpu.memory_space<vmem>>, vector<1x400xf32>
    %227 = vector.shape_cast %226 : vector<1x400xf32> to vector<400xf32>
    %c0_116 = arith.constant 0 : index
    %c7_117 = arith.constant 7 : index
    %228 = vector.load %arg4[%c0_116, %c7_117] : memref<9x28xf32, #tpu.memory_space<vmem>>, vector<9x1xf32>
    %229 = vector.shape_cast %227 : vector<400xf32> to vector<1x400xf32>
    %230 = vector.broadcast %228 : vector<9x1xf32> to vector<9x400xf32>
    %231 = vector.broadcast %229 : vector<1x400xf32> to vector<9x400xf32>
    %232 = arith.mulf %230, %231 : vector<9x400xf32>
    %233 = arith.addf %225, %232 : vector<9x400xf32>
    %c2_118 = arith.constant 2 : index
    %c0_119 = arith.constant 0 : index
    %234 = vector.load %arg7[%c2_118, %c0_119] : memref<7x421xf32, #tpu.memory_space<vmem>>, vector<1x400xf32>
    %235 = vector.shape_cast %234 : vector<1x400xf32> to vector<400xf32>
    %c0_120 = arith.constant 0 : index
    %c8_121 = arith.constant 8 : index
    %236 = vector.load %arg4[%c0_120, %c8_121] : memref<9x28xf32, #tpu.memory_space<vmem>>, vector<9x1xf32>
    %237 = vector.shape_cast %235 : vector<400xf32> to vector<1x400xf32>
    %238 = vector.broadcast %236 : vector<9x1xf32> to vector<9x400xf32>
    %239 = vector.broadcast %237 : vector<1x400xf32> to vector<9x400xf32>
    %240 = arith.mulf %238, %239 : vector<9x400xf32>
    %241 = arith.addf %233, %240 : vector<9x400xf32>
    %c2_122 = arith.constant 2 : index
    %c1_123 = arith.constant 1 : index
    %242 = vector.load %arg7[%c2_122, %c1_123] : memref<7x421xf32, #tpu.memory_space<vmem>>, vector<1x400xf32>
    %243 = vector.shape_cast %242 : vector<1x400xf32> to vector<400xf32>
    %c0_124 = arith.constant 0 : index
    %c9_125 = arith.constant 9 : index
    %244 = vector.load %arg4[%c0_124, %c9_125] : memref<9x28xf32, #tpu.memory_space<vmem>>, vector<9x1xf32>
    %245 = vector.shape_cast %243 : vector<400xf32> to vector<1x400xf32>
    %246 = vector.broadcast %244 : vector<9x1xf32> to vector<9x400xf32>
    %247 = vector.broadcast %245 : vector<1x400xf32> to vector<9x400xf32>
    %248 = arith.mulf %246, %247 : vector<9x400xf32>
    %249 = arith.addf %241, %248 : vector<9x400xf32>
    %c2_126 = arith.constant 2 : index
    %c20_127 = arith.constant 20 : index
    %250 = vector.load %arg7[%c2_126, %c20_127] : memref<7x421xf32, #tpu.memory_space<vmem>>, vector<1x400xf32>
    %251 = vector.shape_cast %250 : vector<1x400xf32> to vector<400xf32>
    %c0_128 = arith.constant 0 : index
    %c10_129 = arith.constant 10 : index
    %252 = vector.load %arg4[%c0_128, %c10_129] : memref<9x28xf32, #tpu.memory_space<vmem>>, vector<9x1xf32>
    %253 = vector.shape_cast %251 : vector<400xf32> to vector<1x400xf32>
    %254 = vector.broadcast %252 : vector<9x1xf32> to vector<9x400xf32>
    %255 = vector.broadcast %253 : vector<1x400xf32> to vector<9x400xf32>
    %256 = arith.mulf %254, %255 : vector<9x400xf32>
    %257 = arith.addf %249, %256 : vector<9x400xf32>
    %c2_130 = arith.constant 2 : index
    %c21_131 = arith.constant 21 : index
    %258 = vector.load %arg7[%c2_130, %c21_131] : memref<7x421xf32, #tpu.memory_space<vmem>>, vector<1x400xf32>
    %259 = vector.shape_cast %258 : vector<1x400xf32> to vector<400xf32>
    %c0_132 = arith.constant 0 : index
    %c11_133 = arith.constant 11 : index
    %260 = vector.load %arg4[%c0_132, %c11_133] : memref<9x28xf32, #tpu.memory_space<vmem>>, vector<9x1xf32>
    %261 = vector.shape_cast %259 : vector<400xf32> to vector<1x400xf32>
    %262 = vector.broadcast %260 : vector<9x1xf32> to vector<9x400xf32>
    %263 = vector.broadcast %261 : vector<1x400xf32> to vector<9x400xf32>
    %264 = arith.mulf %262, %263 : vector<9x400xf32>
    %265 = arith.addf %257, %264 : vector<9x400xf32>
    %c3_134 = arith.constant 3 : index
    %c0_135 = arith.constant 0 : index
    %266 = vector.load %arg7[%c3_134, %c0_135] : memref<7x421xf32, #tpu.memory_space<vmem>>, vector<1x400xf32>
    %267 = vector.shape_cast %266 : vector<1x400xf32> to vector<400xf32>
    %c0_136 = arith.constant 0 : index
    %c12_137 = arith.constant 12 : index
    %268 = vector.load %arg4[%c0_136, %c12_137] : memref<9x28xf32, #tpu.memory_space<vmem>>, vector<9x1xf32>
    %269 = vector.shape_cast %267 : vector<400xf32> to vector<1x400xf32>
    %270 = vector.broadcast %268 : vector<9x1xf32> to vector<9x400xf32>
    %271 = vector.broadcast %269 : vector<1x400xf32> to vector<9x400xf32>
    %272 = arith.mulf %270, %271 : vector<9x400xf32>
    %273 = arith.addf %265, %272 : vector<9x400xf32>
    %c3_138 = arith.constant 3 : index
    %c1_139 = arith.constant 1 : index
    %274 = vector.load %arg7[%c3_138, %c1_139] : memref<7x421xf32, #tpu.memory_space<vmem>>, vector<1x400xf32>
    %275 = vector.shape_cast %274 : vector<1x400xf32> to vector<400xf32>
    %c0_140 = arith.constant 0 : index
    %c13_141 = arith.constant 13 : index
    %276 = vector.load %arg4[%c0_140, %c13_141] : memref<9x28xf32, #tpu.memory_space<vmem>>, vector<9x1xf32>
    %277 = vector.shape_cast %275 : vector<400xf32> to vector<1x400xf32>
    %278 = vector.broadcast %276 : vector<9x1xf32> to vector<9x400xf32>
    %279 = vector.broadcast %277 : vector<1x400xf32> to vector<9x400xf32>
    %280 = arith.mulf %278, %279 : vector<9x400xf32>
    %281 = arith.addf %273, %280 : vector<9x400xf32>
    %c3_142 = arith.constant 3 : index
    %c20_143 = arith.constant 20 : index
    %282 = vector.load %arg7[%c3_142, %c20_143] : memref<7x421xf32, #tpu.memory_space<vmem>>, vector<1x400xf32>
    %283 = vector.shape_cast %282 : vector<1x400xf32> to vector<400xf32>
    %c0_144 = arith.constant 0 : index
    %c14_145 = arith.constant 14 : index
    %284 = vector.load %arg4[%c0_144, %c14_145] : memref<9x28xf32, #tpu.memory_space<vmem>>, vector<9x1xf32>
    %285 = vector.shape_cast %283 : vector<400xf32> to vector<1x400xf32>
    %286 = vector.broadcast %284 : vector<9x1xf32> to vector<9x400xf32>
    %287 = vector.broadcast %285 : vector<1x400xf32> to vector<9x400xf32>
    %288 = arith.mulf %286, %287 : vector<9x400xf32>
    %289 = arith.addf %281, %288 : vector<9x400xf32>
    %c3_146 = arith.constant 3 : index
    %c21_147 = arith.constant 21 : index
    %290 = vector.load %arg7[%c3_146, %c21_147] : memref<7x421xf32, #tpu.memory_space<vmem>>, vector<1x400xf32>
    %291 = vector.shape_cast %290 : vector<1x400xf32> to vector<400xf32>
    %c0_148 = arith.constant 0 : index
    %c15_149 = arith.constant 15 : index
    %292 = vector.load %arg4[%c0_148, %c15_149] : memref<9x28xf32, #tpu.memory_space<vmem>>, vector<9x1xf32>
    %293 = vector.shape_cast %291 : vector<400xf32> to vector<1x400xf32>
    %294 = vector.broadcast %292 : vector<9x1xf32> to vector<9x400xf32>
    %295 = vector.broadcast %293 : vector<1x400xf32> to vector<9x400xf32>
    %296 = arith.mulf %294, %295 : vector<9x400xf32>
    %297 = arith.addf %289, %296 : vector<9x400xf32>
    %c4_150 = arith.constant 4 : index
    %c0_151 = arith.constant 0 : index
    %298 = vector.load %arg7[%c4_150, %c0_151] : memref<7x421xf32, #tpu.memory_space<vmem>>, vector<1x400xf32>
    %299 = vector.shape_cast %298 : vector<1x400xf32> to vector<400xf32>
    %c0_152 = arith.constant 0 : index
    %c16_153 = arith.constant 16 : index
    %300 = vector.load %arg4[%c0_152, %c16_153] : memref<9x28xf32, #tpu.memory_space<vmem>>, vector<9x1xf32>
    %301 = vector.shape_cast %299 : vector<400xf32> to vector<1x400xf32>
    %302 = vector.broadcast %300 : vector<9x1xf32> to vector<9x400xf32>
    %303 = vector.broadcast %301 : vector<1x400xf32> to vector<9x400xf32>
    %304 = arith.mulf %302, %303 : vector<9x400xf32>
    %305 = arith.addf %297, %304 : vector<9x400xf32>
    %c4_154 = arith.constant 4 : index
    %c1_155 = arith.constant 1 : index
    %306 = vector.load %arg7[%c4_154, %c1_155] : memref<7x421xf32, #tpu.memory_space<vmem>>, vector<1x400xf32>
    %307 = vector.shape_cast %306 : vector<1x400xf32> to vector<400xf32>
    %c0_156 = arith.constant 0 : index
    %c17_157 = arith.constant 17 : index
    %308 = vector.load %arg4[%c0_156, %c17_157] : memref<9x28xf32, #tpu.memory_space<vmem>>, vector<9x1xf32>
    %309 = vector.shape_cast %307 : vector<400xf32> to vector<1x400xf32>
    %310 = vector.broadcast %308 : vector<9x1xf32> to vector<9x400xf32>
    %311 = vector.broadcast %309 : vector<1x400xf32> to vector<9x400xf32>
    %312 = arith.mulf %310, %311 : vector<9x400xf32>
    %313 = arith.addf %305, %312 : vector<9x400xf32>
    %c4_158 = arith.constant 4 : index
    %c20_159 = arith.constant 20 : index
    %314 = vector.load %arg7[%c4_158, %c20_159] : memref<7x421xf32, #tpu.memory_space<vmem>>, vector<1x400xf32>
    %315 = vector.shape_cast %314 : vector<1x400xf32> to vector<400xf32>
    %c0_160 = arith.constant 0 : index
    %c18_161 = arith.constant 18 : index
    %316 = vector.load %arg4[%c0_160, %c18_161] : memref<9x28xf32, #tpu.memory_space<vmem>>, vector<9x1xf32>
    %317 = vector.shape_cast %315 : vector<400xf32> to vector<1x400xf32>
    %318 = vector.broadcast %316 : vector<9x1xf32> to vector<9x400xf32>
    %319 = vector.broadcast %317 : vector<1x400xf32> to vector<9x400xf32>
    %320 = arith.mulf %318, %319 : vector<9x400xf32>
    %321 = arith.addf %313, %320 : vector<9x400xf32>
    %c4_162 = arith.constant 4 : index
    %c21_163 = arith.constant 21 : index
    %322 = vector.load %arg7[%c4_162, %c21_163] : memref<7x421xf32, #tpu.memory_space<vmem>>, vector<1x400xf32>
    %323 = vector.shape_cast %322 : vector<1x400xf32> to vector<400xf32>
    %c0_164 = arith.constant 0 : index
    %c19_165 = arith.constant 19 : index
    %324 = vector.load %arg4[%c0_164, %c19_165] : memref<9x28xf32, #tpu.memory_space<vmem>>, vector<9x1xf32>
    %325 = vector.shape_cast %323 : vector<400xf32> to vector<1x400xf32>
    %326 = vector.broadcast %324 : vector<9x1xf32> to vector<9x400xf32>
    %327 = vector.broadcast %325 : vector<1x400xf32> to vector<9x400xf32>
    %328 = arith.mulf %326, %327 : vector<9x400xf32>
    %329 = arith.addf %321, %328 : vector<9x400xf32>
    %c5_166 = arith.constant 5 : index
    %c0_167 = arith.constant 0 : index
    %330 = vector.load %arg7[%c5_166, %c0_167] : memref<7x421xf32, #tpu.memory_space<vmem>>, vector<1x400xf32>
    %331 = vector.shape_cast %330 : vector<1x400xf32> to vector<400xf32>
    %c0_168 = arith.constant 0 : index
    %c20_169 = arith.constant 20 : index
    %332 = vector.load %arg4[%c0_168, %c20_169] : memref<9x28xf32, #tpu.memory_space<vmem>>, vector<9x1xf32>
    %333 = vector.shape_cast %331 : vector<400xf32> to vector<1x400xf32>
    %334 = vector.broadcast %332 : vector<9x1xf32> to vector<9x400xf32>
    %335 = vector.broadcast %333 : vector<1x400xf32> to vector<9x400xf32>
    %336 = arith.mulf %334, %335 : vector<9x400xf32>
    %337 = arith.addf %329, %336 : vector<9x400xf32>
    %c5_170 = arith.constant 5 : index
    %c1_171 = arith.constant 1 : index
    %338 = vector.load %arg7[%c5_170, %c1_171] : memref<7x421xf32, #tpu.memory_space<vmem>>, vector<1x400xf32>
    %339 = vector.shape_cast %338 : vector<1x400xf32> to vector<400xf32>
    %c0_172 = arith.constant 0 : index
    %c21_173 = arith.constant 21 : index
    %340 = vector.load %arg4[%c0_172, %c21_173] : memref<9x28xf32, #tpu.memory_space<vmem>>, vector<9x1xf32>
    %341 = vector.shape_cast %339 : vector<400xf32> to vector<1x400xf32>
    %342 = vector.broadcast %340 : vector<9x1xf32> to vector<9x400xf32>
    %343 = vector.broadcast %341 : vector<1x400xf32> to vector<9x400xf32>
    %344 = arith.mulf %342, %343 : vector<9x400xf32>
    %345 = arith.addf %337, %344 : vector<9x400xf32>
    %c5_174 = arith.constant 5 : index
    %c20_175 = arith.constant 20 : index
    %346 = vector.load %arg7[%c5_174, %c20_175] : memref<7x421xf32, #tpu.memory_space<vmem>>, vector<1x400xf32>
    %347 = vector.shape_cast %346 : vector<1x400xf32> to vector<400xf32>
    %c0_176 = arith.constant 0 : index
    %c22 = arith.constant 22 : index
    %348 = vector.load %arg4[%c0_176, %c22] : memref<9x28xf32, #tpu.memory_space<vmem>>, vector<9x1xf32>
    %349 = vector.shape_cast %347 : vector<400xf32> to vector<1x400xf32>
    %350 = vector.broadcast %348 : vector<9x1xf32> to vector<9x400xf32>
    %351 = vector.broadcast %349 : vector<1x400xf32> to vector<9x400xf32>
    %352 = arith.mulf %350, %351 : vector<9x400xf32>
    %353 = arith.addf %345, %352 : vector<9x400xf32>
    %c5_177 = arith.constant 5 : index
    %c21_178 = arith.constant 21 : index
    %354 = vector.load %arg7[%c5_177, %c21_178] : memref<7x421xf32, #tpu.memory_space<vmem>>, vector<1x400xf32>
    %355 = vector.shape_cast %354 : vector<1x400xf32> to vector<400xf32>
    %c0_179 = arith.constant 0 : index
    %c23 = arith.constant 23 : index
    %356 = vector.load %arg4[%c0_179, %c23] : memref<9x28xf32, #tpu.memory_space<vmem>>, vector<9x1xf32>
    %357 = vector.shape_cast %355 : vector<400xf32> to vector<1x400xf32>
    %358 = vector.broadcast %356 : vector<9x1xf32> to vector<9x400xf32>
    %359 = vector.broadcast %357 : vector<1x400xf32> to vector<9x400xf32>
    %360 = arith.mulf %358, %359 : vector<9x400xf32>
    %361 = arith.addf %353, %360 : vector<9x400xf32>
    %c6_180 = arith.constant 6 : index
    %c0_181 = arith.constant 0 : index
    %362 = vector.load %arg7[%c6_180, %c0_181] : memref<7x421xf32, #tpu.memory_space<vmem>>, vector<1x400xf32>
    %363 = vector.shape_cast %362 : vector<1x400xf32> to vector<400xf32>
    %c0_182 = arith.constant 0 : index
    %c24 = arith.constant 24 : index
    %364 = vector.load %arg4[%c0_182, %c24] : memref<9x28xf32, #tpu.memory_space<vmem>>, vector<9x1xf32>
    %365 = vector.shape_cast %363 : vector<400xf32> to vector<1x400xf32>
    %366 = vector.broadcast %364 : vector<9x1xf32> to vector<9x400xf32>
    %367 = vector.broadcast %365 : vector<1x400xf32> to vector<9x400xf32>
    %368 = arith.mulf %366, %367 : vector<9x400xf32>
    %369 = arith.addf %361, %368 : vector<9x400xf32>
    %c6_183 = arith.constant 6 : index
    %c1_184 = arith.constant 1 : index
    %370 = vector.load %arg7[%c6_183, %c1_184] : memref<7x421xf32, #tpu.memory_space<vmem>>, vector<1x400xf32>
    %371 = vector.shape_cast %370 : vector<1x400xf32> to vector<400xf32>
    %c0_185 = arith.constant 0 : index
    %c25 = arith.constant 25 : index
    %372 = vector.load %arg4[%c0_185, %c25] : memref<9x28xf32, #tpu.memory_space<vmem>>, vector<9x1xf32>
    %373 = vector.shape_cast %371 : vector<400xf32> to vector<1x400xf32>
    %374 = vector.broadcast %372 : vector<9x1xf32> to vector<9x400xf32>
    %375 = vector.broadcast %373 : vector<1x400xf32> to vector<9x400xf32>
    %376 = arith.mulf %374, %375 : vector<9x400xf32>
    %377 = arith.addf %369, %376 : vector<9x400xf32>
    %c6_186 = arith.constant 6 : index
    %c20_187 = arith.constant 20 : index
    %378 = vector.load %arg7[%c6_186, %c20_187] : memref<7x421xf32, #tpu.memory_space<vmem>>, vector<1x400xf32>
    %379 = vector.shape_cast %378 : vector<1x400xf32> to vector<400xf32>
    %c0_188 = arith.constant 0 : index
    %c26 = arith.constant 26 : index
    %380 = vector.load %arg4[%c0_188, %c26] : memref<9x28xf32, #tpu.memory_space<vmem>>, vector<9x1xf32>
    %381 = vector.shape_cast %379 : vector<400xf32> to vector<1x400xf32>
    %382 = vector.broadcast %380 : vector<9x1xf32> to vector<9x400xf32>
    %383 = vector.broadcast %381 : vector<1x400xf32> to vector<9x400xf32>
    %384 = arith.mulf %382, %383 : vector<9x400xf32>
    %385 = arith.addf %377, %384 : vector<9x400xf32>
    %c6_189 = arith.constant 6 : index
    %c21_190 = arith.constant 21 : index
    %386 = vector.load %arg7[%c6_189, %c21_190] : memref<7x421xf32, #tpu.memory_space<vmem>>, vector<1x400xf32>
    %387 = vector.shape_cast %386 : vector<1x400xf32> to vector<400xf32>
    %c0_191 = arith.constant 0 : index
    %c27 = arith.constant 27 : index
    %388 = vector.load %arg4[%c0_191, %c27] : memref<9x28xf32, #tpu.memory_space<vmem>>, vector<9x1xf32>
    %389 = vector.shape_cast %387 : vector<400xf32> to vector<1x400xf32>
    %390 = vector.broadcast %388 : vector<9x1xf32> to vector<9x400xf32>
    %391 = vector.broadcast %389 : vector<1x400xf32> to vector<9x400xf32>
    %392 = arith.mulf %390, %391 : vector<9x400xf32>
    %393 = arith.addf %385, %392 : vector<9x400xf32>
    %c0_192 = arith.constant 0 : index
    %c0_193 = arith.constant 0 : index
    %394 = vector.load %arg5[%c0_192, %c0_193] : memref<9x1xf32, #tpu.memory_space<vmem>>, vector<9x1xf32>
    %395 = vector.broadcast %394 : vector<9x1xf32> to vector<9x400xf32>
    %396 = arith.addf %393, %395 : vector<9x400xf32>
    %cst_194 = arith.constant 0.000000e+00 : f32
    %397 = vector.broadcast %cst_194 : f32 to vector<9x400xf32>
    %398 = arith.maximumf %396, %397 : vector<9x400xf32>
    %cst_195 = arith.constant 3.000000e+00 : f32
    %399 = vector.broadcast %cst_195 : f32 to vector<9x400xf32>
    %400 = arith.subf %398, %399 : vector<9x400xf32>
    %cst_196 = arith.constant 0.000000e+00 : f32
    %cst_197 = arith.constant 6.000000e+00 : f32
    %401 = vector.broadcast %cst_196 : f32 to vector<9x400xf32>
    %402 = arith.maximumf %401, %400 : vector<9x400xf32>
    %403 = vector.broadcast %cst_197 : f32 to vector<9x400xf32>
    %404 = arith.minimumf %403, %402 : vector<9x400xf32>
    %c0_198 = arith.constant 0 : index
    %c0_199 = arith.constant 0 : index
    %c0_200 = arith.constant 0 : index
    %405 = vector.load %arg6[%c0_198, %c0_199, %c0_200] : memref<1x9x400xf32, #tpu.memory_space<vmem>>, vector<1x9x400xf32>
    %406 = vector.shape_cast %405 : vector<1x9x400xf32> to vector<9x400xf32>
    %407 = vector.shape_cast %404 : vector<9x400xf32> to vector<1x9x400xf32>
    tpu.vector_store %arg6[%c0_198, %c0_199, %c0_200], %407 {strides = array<i32>} : memref<1x9x400xf32, #tpu.memory_space<vmem>>, vector<1x9x400xf32>,
    return
  }
  func.func @transform_0(%arg0: i32) -> (i32, i32, i32) {
    %c0_i32 = arith.constant 0 : i32
    %c0_i32_0 = arith.constant 0 : i32
    %c0_i32_1 = arith.constant 0 : i32
    return %arg0, %c0_i32, %c0_i32_0 : i32, i32, i32
  }
  func.func @transform_1(%arg0: i32) -> (i32, i32) {
    %c0_i32 = arith.constant 0 : i32
    %c0_i32_0 = arith.constant 0 : i32
    %c0_i32_1 = arith.constant 0 : i32
    return %c0_i32, %c0_i32_0 : i32, i32
  }
  func.func @transform_2(%arg0: i32) -> (i32, i32) {
    %c0_i32 = arith.constant 0 : i32
    %c0_i32_0 = arith.constant 0 : i32
    %c0_i32_1 = arith.constant 0 : i32
    return %c0_i32, %c0_i32_0 : i32, i32
  }
  func.func @transform_3(%arg0: i32) -> (i32, i32) {
    %c0_i32 = arith.constant 0 : i32
    %c0_i32_0 = arith.constant 0 : i32
    %c0_i32_1 = arith.constant 0 : i32
    return %c0_i32, %c0_i32_0 : i32, i32
  }
  func.func @transform_4(%arg0: i32) -> (i32, i32) {
    %c0_i32 = arith.constant 0 : i32
    %c0_i32_0 = arith.constant 0 : i32
    %c0_i32_1 = arith.constant 0 : i32
    return %c0_i32, %c0_i32_0 : i32, i32
  }
  func.func @transform_5(%arg0: i32) -> (i32, i32, i32) {
    %c0_i32 = arith.constant 0 : i32
    %c0_i32_0 = arith.constant 0 : i32
    %c0_i32_1 = arith.constant 0 : i32
    return %arg0, %c0_i32, %c0_i32_0 : i32, i32, i32
  }
}

</mosaic_0001>

<llo_original>
// kernel: model_forward.1
$region0: #{model_forward.1}
  #allocation0 [shape = 'u32[]', space=smem, size = 0x4, offset = 0x4, fixed_abs, tag = 'smem constant byte address 0x4 - core index']
  #allocation1 [shape = 'u32[144,128]{1,0:T(1,128)}', space=vmem, size = 0x12000, scoped, tag = 'internal scratch']
  #allocation2 [shape = 'f32[7,421]{1,0:T(8,128)}', space=vmem, size = 0x4000, scoped, tag = 'scratch operand']
  %s0 = inlined_call_operand.vmem [shape: f32[2,5,421], index: 0, kind: input, shape index: {}]
  %s1 = inlined_call_operand.vmem [shape: f32[7,20], index: 1, kind: input, shape index: {}]
  %s2 = inlined_call_operand.vmem [shape: f32[7,1], index: 2, kind: input, shape index: {}]
  %s3 = inlined_call_operand.vmem [shape: f32[9,28], index: 3, kind: input, shape index: {}]
  %s4 = inlined_call_operand.vmem [shape: f32[9,1], index: 4, kind: input, shape index: {}]
  %s5 = inlined_call_operand.vmem [shape: f32[2,9,400], index: 5, kind: output, shape index: {}]
  %s6 = sld [smem:[#allocation0]]
  $region53: #{model_forward.1} parent=0
    _
  %s8 = ssub.s32 1, %s6
  %s9 = scalar_select 0, %s8, %s6
  loop: start=0, step=1, limit=4
  $region2: #{model_forward.1} parent=0 // loop_pre_header
    _
  $region3: #{model_forward.1} parent=0 // loop_header
    %s11 = sphi 0, %s15
    %p12 = scmp.ge.s32.totalorder %s11, 4
    %s21 = sphi 0, %s23
    %s24 = sphi 0, %s21
    %s25 = sphi 0, %s24
    %s41 = sphi 0, %s25
    %s45 = sphi 0, %s45
    %s47 = sphi 0, %s45
    %s48 = sphi 0, %s47
    %s62 = sphi 0, %s48
    %s66 = sphi 0, %s66
    %s68 = sphi 0, %s66
    %s69 = sphi 0, %s68
    %s83 = sphi 0, %s69
    %s87 = sphi 0, %s87
    %s89 = sphi 0, %s87
    %s90 = sphi 0, %s89
    %s104 = sphi 0, %s90
    %s108 = sphi 0, %s108
    %s110 = sphi 0, %s108
    %s111 = sphi 0, %s110
    %s125 = sphi 0, %s111
    %s131 = sphi 0, %s133
    %s134 = sphi 0, %s131
    %s135 = sphi 0, %s134
    %s151 = sphi 0, %s135
  $region4: #{model_forward.1} parent=0 // loop_header_branch
    %14 = sbr.rel (%p12) target = $region8
  $region5: #{model_forward.1} parent=0 // loop_body
    %s16 = ssub.s32 %s11, 1
    %s17 = ssub.s32 %s11, 2
    %s18 = sadd.s32 %s11, 1
    %s19 = ssub.s32 %s11, %s18
    %p20 = scmp.eq.s32.totalorder %s19, 0
    %s22 = sadd.s32 %s21, 1
    %s23 = scalar_select %p20, %s21, %s22
    %p26 = pneg %p20
    %p27 = scmp.eq.s32.totalorder %s11, 1
    %p28 = por %p26, %p27
    %p29 = scmp.ne.s32.totalorder %s21, %s24
    %p30 = scmp.eq.s32.totalorder %s11, 0
    %p31 = por %p29, %p30
    %p32 = scmp.ne.s32.totalorder %s21, %s24
    %p33 = scmp.eq.s32.totalorder %s16, 1
    %p34 = por %p32, %p33
    %p35 = scmp.ne.s32.totalorder %s24, %s25
    %p36 = scmp.eq.s32.totalorder %s16, 0
    %p37 = por %p35, %p36
    %p38 = scmp.ne.s32.totalorder %s24, %s25
    %p39 = scmp.eq.s32.totalorder %s17, 1
    %p40 = por %p38, %p39
    %p42 = scmp.ne.s32.totalorder %s25, %s41
    %p43 = scmp.eq.s32.totalorder %s17, 0
    %p44 = por %p42, %p43
    %s46 = sadd.s32 %s45, 1
    %p49 = scmp.eq.s32.totalorder %s11, 1
    %p50 = scmp.ne.s32.totalorder %s45, %s47
    %p51 = scmp.eq.s32.totalorder %s11, 0
    %p52 = por %p50, %p51
    %p53 = scmp.ne.s32.totalorder %s45, %s47
    %p54 = scmp.eq.s32.totalorder %s16, 1
    %p55 = por %p53, %p54
    %p56 = scmp.ne.s32.totalorder %s47, %s48
    %p57 = scmp.eq.s32.totalorder %s16, 0
    %p58 = por %p56, %p57
    %p59 = scmp.ne.s32.totalorder %s47, %s48
    %p60 = scmp.eq.s32.totalorder %s17, 1
    %p61 = por %p59, %p60
    %p63 = scmp.ne.s32.totalorder %s48, %s62
    %p64 = scmp.eq.s32.totalorder %s17, 0
    %p65 = por %p63, %p64
    %s67 = sadd.s32 %s66, 1
    %p70 = scmp.eq.s32.totalorder %s11, 1
    %p71 = scmp.ne.s32.totalorder %s66, %s68
    %p72 = scmp.eq.s32.totalorder %s11, 0
    %p73 = por %p71, %p72
    %p74 = scmp.ne.s32.totalorder %s66, %s68
    %p75 = scmp.eq.s32.totalorder %s16, 1
    %p76 = por %p74, %p75
    %p77 = scmp.ne.s32.totalorder %s68, %s69
    %p78 = scmp.eq.s32.totalorder %s16, 0
    %p79 = por %p77, %p78
    %p80 = scmp.ne.s32.totalorder %s68, %s69
    %p81 = scmp.eq.s32.totalorder %s17, 1
    %p82 = por %p80, %p81
    %p84 = scmp.ne.s32.totalorder %s69, %s83
    %p85 = scmp.eq.s32.totalorder %s17, 0
    %p86 = por %p84, %p85
    %s88 = sadd.s32 %s87, 1
    %p91 = scmp.eq.s32.totalorder %s11, 1
    %p92 = scmp.ne.s32.totalorder %s87, %s89
    %p93 = scmp.eq.s32.totalorder %s11, 0
    %p94 = por %p92, %p93
    %p95 = scmp.ne.s32.totalorder %s87, %s89
    %p96 = scmp.eq.s32.totalorder %s16, 1
    %p97 = por %p95, %p96
    %p98 = scmp.ne.s32.totalorder %s89, %s90
    %p99 = scmp.eq.s32.totalorder %s16, 0
    %p100 = por %p98, %p99
    %p101 = scmp.ne.s32.totalorder %s89, %s90
    %p102 = scmp.eq.s32.totalorder %s17, 1
    %p103 = por %p101, %p102
    %p105 = scmp.ne.s32.totalorder %s90, %s104
    %p106 = scmp.eq.s32.totalorder %s17, 0
    %p107 = por %p105, %p106
    %s109 = sadd.s32 %s108, 1
    %p112 = scmp.eq.s32.totalorder %s11, 1
    %p113 = scmp.ne.s32.totalorder %s108, %s110
    %p114 = scmp.eq.s32.totalorder %s11, 0
    %p115 = por %p113, %p114
    %p116 = scmp.ne.s32.totalorder %s108, %s110
    %p117 = scmp.eq.s32.totalorder %s16, 1
    %p118 = por %p116, %p117
    %p119 = scmp.ne.s32.totalorder %s110, %s111
    %p120 = scmp.eq.s32.totalorder %s16, 0
    %p121 = por %p119, %p120
    %p122 = scmp.ne.s32.totalorder %s110, %s111
    %p123 = scmp.eq.s32.totalorder %s17, 1
    %p124 = por %p122, %p123
    %p126 = scmp.ne.s32.totalorder %s111, %s125
    %p127 = scmp.eq.s32.totalorder %s17, 0
    %p128 = por %p126, %p127
    %s129 = ssub.s32 %s11, %s18
    %p130 = scmp.eq.s32.totalorder %s129, 0
    %s132 = sadd.s32 %s131, 1
    %s133 = scalar_select %p130, %s131, %s132
    %p136 = pneg %p130
    %p137 = scmp.eq.s32.totalorder %s11, 1
    %p138 = por %p136, %p137
    %p139 = scmp.ne.s32.totalorder %s131, %s134
    %p140 = scmp.eq.s32.totalorder %s11, 0
    %p141 = por %p139, %p140
    %p142 = scmp.ne.s32.totalorder %s131, %s134
    %p143 = scmp.eq.s32.totalorder %s16, 1
    %p144 = por %p142, %p143
    %p145 = scmp.ne.s32.totalorder %s134, %s135
    %p146 = scmp.eq.s32.totalorder %s16, 0
    %p147 = por %p145, %p146
    %p148 = scmp.ne.s32.totalorder %s134, %s135
    %p149 = scmp.eq.s32.totalorder %s17, 1
    %p150 = por %p148, %p149
    %p152 = scmp.ne.s32.totalorder %s135, %s151
    %p153 = scmp.eq.s32.totalorder %s17, 0
    %p154 = por %p152, %p153
    %p155 = scmp.le.s32.totalorder 1, %s11
    %p156 = scmp.lt.s32.totalorder %s11, 3
    %p157 = pnand %p155, %p156
    %p158 = pneg %p157
    // Predicated region
    $region9: #{model_forward.1} parent=5 // pred_check
      _
    $region10: #{model_forward.1} parent=5 // pred_check_branch
      %160 = sbr.rel (%p157) target = $region12
    $region11: #{model_forward.1} parent=5 // pred_region
      %s161 = ssub.s32 %s11, 1
      // Predicated region
      $region13: #{model_forward.1} parent=11 // pred_check
        %p162 = pneg %p58
      $region14: #{model_forward.1} parent=11 // pred_check_branch
        %164 = sbr.rel (%p162) target = $region16
      $region15: #{model_forward.1} parent=11 // pred_region
        _
      $region16: #{model_forward.1} parent=11 // pred_fallthru
        _
      // Predicated region
      $region17: #{model_forward.1} parent=11 // pred_check
        %p165 = pneg %p79
      $region18: #{model_forward.1} parent=11 // pred_check_branch
        %167 = sbr.rel (%p165) target = $region20
      $region19: #{model_forward.1} parent=11 // pred_region
        _
      $region20: #{model_forward.1} parent=11 // pred_fallthru
        _
      // Predicated region
      $region21: #{model_forward.1} parent=11 // pred_check
        %p168 = pneg %p100
      $region22: #{model_forward.1} parent=11 // pred_check_branch
        %170 = sbr.rel (%p168) target = $region24
      $region23: #{model_forward.1} parent=11 // pred_region
        _
      $region24: #{model_forward.1} parent=11 // pred_fallthru
        _
      // Predicated region
      $region25: #{model_forward.1} parent=11 // pred_check
        %p171 = pneg %p121
      $region26: #{model_forward.1} parent=11 // pred_check_branch
        %173 = sbr.rel (%p171) target = $region28
      $region27: #{model_forward.1} parent=11 // pred_region
        _
      $region28: #{model_forward.1} parent=11 // pred_fallthru
        _
    $region12: #{model_forward.1} parent=5 // pred_fallthru
      _
    %p174 = scmp.lt.s32.totalorder %s11, 2
    // Predicated region
    $region29: #{model_forward.1} parent=5 // pred_check
      %p175 = pneg %p174
    $region30: #{model_forward.1} parent=5 // pred_check_branch
      %177 = sbr.rel (%p175) target = $region32
    $region31: #{model_forward.1} parent=5 // pred_region
      // Predicated region
      $region33: #{model_forward.1} parent=31 // pred_check
        %p178 = pneg %p31
      $region34: #{model_forward.1} parent=31 // pred_check_branch
        %180 = sbr.rel (%p178) target = $region36
      $region35: #{model_forward.1} parent=31 // pred_region
        %p181 = scmp.lt.s32.totalorder %s11, 1
        %s182 = scalar_select %p181, %s11, 1
        %s183 = smul.addr %s182, 4
        %s184 = smul.addr %s183, 8
        %s185 = scalar_lea.vmem %s0, %s184
      $region36: #{model_forward.1} parent=31 // pred_fallthru
        _
    $region32: #{model_forward.1} parent=5 // pred_fallthru
      _
    %p186 = scmp.le.s32.totalorder 1, %s11
    %p187 = scmp.lt.s32.totalorder %s11, 3
    %p188 = pnand %p186, %p187
    %p189 = pneg %p188
    // Predicated region
    $region37: #{model_forward.1} parent=5 // pred_check
      _
    $region38: #{model_forward.1} parent=5 // pred_check_branch
      %191 = sbr.rel (%p188) target = $region40
    $region39: #{model_forward.1} parent=5 // pred_region
      %s192 = ssub.s32 %s11, 1
      %p193 = scmp.lt.s32.totalorder %s16, 1
      %s194 = scalar_select %p193, %s16, 1
      %s195 = smul.addr %s194, 4
      %s196 = smul.addr %s195, 8
      %s197 = scalar_lea.vmem %s0, %s196
      %p198 = pneg %p37
      %p199 = pneg %p34
      %p200 = pneg %p58
      %p201 = pneg %p55
      %p202 = pneg %p79
      %p203 = pneg %p76
      %p204 = pneg %p100
      %p205 = pneg %p97
      %p206 = pneg %p121
      %p207 = pneg %p118
      %p208 = pneg %p147
      %p209 = pneg %p144
      %p210 = scmp.lt.s32.totalorder %s16, 1
      %s211 = scalar_select %p210, %s16, 1
      %s212 = smul.addr %s211, 8
      %s213 = smul.addr %s212, 8
      %s214 = scalar_lea.vmem %s5, %s213
      %p215 = scmp.lt.s32.totalorder %s16, 1
      %s216 = scalar_select %p215, %s16, 1
      %s217 = smul.addr %s216, 4
      %s218 = smul.addr %s217, 8
      %s219 = scalar_lea.vmem %s0, %s218
      %p220 = scmp.lt.s32.totalorder %s16, 1
      %s221 = scalar_select %p220, %s16, 1
      %s222 = smul.addr %s221, 8
      %s223 = smul.addr %s222, 8
      %s224 = scalar_lea.vmem %s5, %s223
      %v225 = vld [vmem:[%s219] ss:$8 sm:$0xf]
      %v226 = vld [vmem:[%s1] sm:$0x7f]
      %228 = vset.pattern.permute.xlu0 0
      %229 = vperm.xlu0 %228, %v226
      %v230 = vpop.permute.xlu0 %229
      %v233 = vlaneseq
      %v234 = vshrl.u32 %v233, 7
      %v235 = vsub.s32 0, %v234
      %v236 = vrot.slane %v225, %v235
      %v237 = vlaneseq
      %v238 = vshrl.u32 %v237, 7
      %v239 = vsub.s32 1, %v238
      %v240 = vrot.slane %v225, %v239
      %v241 = vlaneseq
      %v242 = vshrl.u32 %v241, 7
      %v243 = vsub.s32 2, %v242
      %v244 = vrot.slane %v225, %v243
      %v245 = vlaneseq
      %v246 = vshrl.u32 %v245, 7
      %v247 = vsub.s32 3, %v246
      %v248 = vrot.slane %v225, %v247
      %v253 = vmul.f32 %v230, %v236
      %v254 = vmul.f32 %v230, %v240
      %v255 = vmul.f32 %v230, %v244
      %v256 = vmul.f32 %v230, %v248
      %v257 = vadd.f32 %v253, 0.0
      %v258 = vadd.f32 %v254, 0.0
      %v259 = vadd.f32 %v255, 0.0
      %v260 = vadd.f32 %v256, 0.0
      %261 = vset.pattern.permute.xlu0 1
      %262 = vperm.xlu0 %261, %v226
      %v263 = vpop.permute.xlu0 %262
      %v265 = vmul.f32 %v263, %v236
      %v266 = vmul.f32 %v263, %v240
      %v267 = vmul.f32 %v263, %v244
      %v268 = vmul.f32 %v263, %v248
      %273 = vrot.lane.b32.xlu0 %v265, 127
      %v274 = vpop.permute.xlu0 %273
      %275 = vrot.lane.b32.xlu0 %v266, 127
      %v276 = vpop.permute.xlu0 %275
      %277 = vrot.lane.b32.xlu0 %v267, 127
      %v278 = vpop.permute.xlu0 %277
      %279 = vrot.lane.b32.xlu0 %v268, 127
      %v280 = vpop.permute.xlu0 %279
      %vm281 = vcmask 1039360
      %v282 = vsel %vm281, %v274, %v276
      %v283 = vsel %vm281, %v276, %v278
      %v284 = vsel %vm281, %v278, %v280
      %v289 = vadd.f32 %v257, %v282
      %v290 = vadd.f32 %v258, %v283
      %v291 = vadd.f32 %v259, %v284
      %v292 = vadd.f32 %v260, %v280
      %293 = vset.pattern.permute.xlu0 2
      %294 = vperm.xlu0 %293, %v226
      %v295 = vpop.permute.xlu0 %294
      %v297 = vmul.f32 %v295, %v236
      %v298 = vmul.f32 %v295, %v240
      %v299 = vmul.f32 %v295, %v244
      %v300 = vmul.f32 %v295, %v248
      %305 = vrot.lane.b32.xlu0 %v297, 108
      %v306 = vpop.permute.xlu0 %305
      %307 = vrot.lane.b32.xlu0 %v298, 108
      %v308 = vpop.permute.xlu0 %307
      %309 = vrot.lane.b32.xlu0 %v299, 108
      %v310 = vpop.permute.xlu0 %309
      %311 = vrot.lane.b32.xlu0 %v300, 108
      %v312 = vpop.permute.xlu0 %311
      %vm313 = vcmask 883712
      %v314 = vsel %vm313, %v306, %v308
      %v315 = vsel %vm313, %v308, %v310
      %v316 = vsel %vm313, %v310, %v312
      %v321 = vadd.f32 %v289, %v314
      %v322 = vadd.f32 %v290, %v315
      %v323 = vadd.f32 %v291, %v316
      %v324 = vadd.f32 %v292, %v312
      %325 = vset.pattern.permute.xlu0 3
      %326 = vperm.xlu0 %325, %v226
      %v327 = vpop.permute.xlu0 %326
      %v329 = vmul.f32 %v327, %v236
      %v330 = vmul.f32 %v327, %v240
      %v331 = vmul.f32 %v327, %v244
      %v332 = vmul.f32 %v327, %v248
      %337 = vrot.lane.b32.xlu0 %v329, 107
      %v338 = vpop.permute.xlu0 %337
      %339 = vrot.lane.b32.xlu0 %v330, 107
      %v340 = vpop.permute.xlu0 %339
      %341 = vrot.lane.b32.xlu0 %v331, 107
      %v342 = vpop.permute.xlu0 %341
      %343 = vrot.lane.b32.xlu0 %v332, 107
      %v344 = vpop.permute.xlu0 %343
      %vm345 = vcmask 875520
      %v346 = vsel %vm345, %v338, %v340
      %v347 = vsel %vm345, %v340, %v342
      %v348 = vsel %vm345, %v342, %v344
      %v353 = vadd.f32 %v321, %v346
      %v354 = vadd.f32 %v322, %v347
      %v355 = vadd.f32 %v323, %v348
      %v356 = vadd.f32 %v324, %v344
      %s357 = scalar_lea.vmem %s219, 1
      %v358 = vld [vmem:[%s357] ss:$8 sm:$0xf]
      %359 = vset.pattern.permute.xlu0 4
      %360 = vperm.xlu0 %359, %v226
      %v361 = vpop.permute.xlu0 %360
      %v364 = vlaneseq
      %v365 = vshrl.u32 %v364, 7
      %v366 = vsub.s32 0, %v365
      %v367 = vrot.slane %v358, %v366
      %v368 = vlaneseq
      %v369 = vshrl.u32 %v368, 7
      %v370 = vsub.s32 1, %v369
      %v371 = vrot.slane %v358, %v370
      %v372 = vlaneseq
      %v373 = vshrl.u32 %v372, 7
      %v374 = vsub.s32 2, %v373
      %v375 = vrot.slane %v358, %v374
      %v376 = vlaneseq
      %v377 = vshrl.u32 %v376, 7
      %v378 = vsub.s32 3, %v377
      %v379 = vrot.slane %v358, %v378
      %v384 = vmul.f32 %v361, %v367
      %v385 = vmul.f32 %v361, %v371
      %v386 = vmul.f32 %v361, %v375
      %v387 = vmul.f32 %v361, %v379
      %v388 = vadd.f32 %v353, %v384
      %v389 = vadd.f32 %v354, %v385
      %v390 = vadd.f32 %v355, %v386
      %v391 = vadd.f32 %v356, %v387
      %392 = vset.pattern.permute.xlu0 5
      %393 = vperm.xlu0 %392, %v226
      %v394 = vpop.permute.xlu0 %393
      %v396 = vmul.f32 %v394, %v367
      %v397 = vmul.f32 %v394, %v371
      %v398 = vmul.f32 %v394, %v375
      %v399 = vmul.f32 %v394, %v379
      %404 = vrot.lane.b32.xlu0 %v396, 127
      %v405 = vpop.permute.xlu0 %404
      %406 = vrot.lane.b32.xlu0 %v397, 127
      %v407 = vpop.permute.xlu0 %406
      %408 = vrot.lane.b32.xlu0 %v398, 127
      %v409 = vpop.permute.xlu0 %408
      %410 = vrot.lane.b32.xlu0 %v399, 127
      %v411 = vpop.permute.xlu0 %410
      %v412 = vsel %vm281, %v405, %v407
      %v413 = vsel %vm281, %v407, %v409
      %v414 = vsel %vm281, %v409, %v411
      %v419 = vadd.f32 %v388, %v412
      %v420 = vadd.f32 %v389, %v413
      %v421 = vadd.f32 %v390, %v414
      %v422 = vadd.f32 %v391, %v411
      %423 = vset.pattern.permute.xlu0 6
      %424 = vperm.xlu0 %423, %v226
      %v425 = vpop.permute.xlu0 %424
      %v427 = vmul.f32 %v425, %v367
      %v428 = vmul.f32 %v425, %v371
      %v429 = vmul.f32 %v425, %v375
      %v430 = vmul.f32 %v425, %v379
      %435 = vrot.lane.b32.xlu0 %v427, 108
      %v436 = vpop.permute.xlu0 %435
      %437 = vrot.lane.b32.xlu0 %v428, 108
      %v438 = vpop.permute.xlu0 %437
      %439 = vrot.lane.b32.xlu0 %v429, 108
      %v440 = vpop.permute.xlu0 %439
      %441 = vrot.lane.b32.xlu0 %v430, 108
      %v442 = vpop.permute.xlu0 %441
      %v443 = vsel %vm313, %v436, %v438
      %v444 = vsel %vm313, %v438, %v440
      %v445 = vsel %vm313, %v440, %v442
      %v450 = vadd.f32 %v419, %v443
      %v451 = vadd.f32 %v420, %v444
      %v452 = vadd.f32 %v421, %v445
      %v453 = vadd.f32 %v422, %v442
      %454 = vset.pattern.permute.xlu0 7
      %455 = vperm.xlu0 %454, %v226
      %v456 = vpop.permute.xlu0 %455
      %v458 = vmul.f32 %v456, %v367
      %v459 = vmul.f32 %v456, %v371
      %v460 = vmul.f32 %v456, %v375
      %v461 = vmul.f32 %v456, %v379
      %466 = vrot.lane.b32.xlu0 %v458, 107
      %v467 = vpop.permute.xlu0 %466
      %468 = vrot.lane.b32.xlu0 %v459, 107
      %v469 = vpop.permute.xlu0 %468
      %470 = vrot.lane.b32.xlu0 %v460, 107
      %v471 = vpop.permute.xlu0 %470
      %472 = vrot.lane.b32.xlu0 %v461, 107
      %v473 = vpop.permute.xlu0 %472
      %v474 = vsel %vm345, %v467, %v469
      %v475 = vsel %vm345, %v469, %v471
      %v476 = vsel %vm345, %v471, %v473
      %v481 = vadd.f32 %v450, %v474
      %v482 = vadd.f32 %v451, %v475
      %v483 = vadd.f32 %v452, %v476
      %v484 = vadd.f32 %v453, %v473
      %s485 = scalar_lea.vmem %s219, 2
      %v486 = vld [vmem:[%s485] ss:$8 sm:$0xf]
      %487 = vset.pattern.permute.xlu0 8
      %488 = vperm.xlu0 %487, %v226
      %v489 = vpop.permute.xlu0 %488
      %v492 = vlaneseq
      %v493 = vshrl.u32 %v492, 7
      %v494 = vsub.s32 0, %v493
      %v495 = vrot.slane %v486, %v494
      %v496 = vlaneseq
      %v497 = vshrl.u32 %v496, 7
      %v498 = vsub.s32 1, %v497
      %v499 = vrot.slane %v486, %v498
      %v500 = vlaneseq
      %v501 = vshrl.u32 %v500, 7
      %v502 = vsub.s32 2, %v501
      %v503 = vrot.slane %v486, %v502
      %v504 = vlaneseq
      %v505 = vshrl.u32 %v504, 7
      %v506 = vsub.s32 3, %v505
      %v507 = vrot.slane %v486, %v506
      %v512 = vmul.f32 %v489, %v495
      %v513 = vmul.f32 %v489, %v499
      %v514 = vmul.f32 %v489, %v503
      %v515 = vmul.f32 %v489, %v507
      %v516 = vadd.f32 %v481, %v512
      %v517 = vadd.f32 %v482, %v513
      %v518 = vadd.f32 %v483, %v514
      %v519 = vadd.f32 %v484, %v515
      %520 = vset.pattern.permute.xlu0 9
      %521 = vperm.xlu0 %520, %v226
      %v522 = vpop.permute.xlu0 %521
      %v524 = vmul.f32 %v522, %v495
      %v525 = vmul.f32 %v522, %v499
      %v526 = vmul.f32 %v522, %v503
      %v527 = vmul.f32 %v522, %v507
      %532 = vrot.lane.b32.xlu0 %v524, 127
      %v533 = vpop.permute.xlu0 %532
      %534 = vrot.lane.b32.xlu0 %v525, 127
      %v535 = vpop.permute.xlu0 %534
      %536 = vrot.lane.b32.xlu0 %v526, 127
      %v537 = vpop.permute.xlu0 %536
      %538 = vrot.lane.b32.xlu0 %v527, 127
      %v539 = vpop.permute.xlu0 %538
      %v540 = vsel %vm281, %v533, %v535
      %v541 = vsel %vm281, %v535, %v537
      %v542 = vsel %vm281, %v537, %v539
      %v547 = vadd.f32 %v516, %v540
      %v548 = vadd.f32 %v517, %v541
      %v549 = vadd.f32 %v518, %v542
      %v550 = vadd.f32 %v519, %v539
      %551 = vset.pattern.permute.xlu0 10
      %552 = vperm.xlu0 %551, %v226
      %v553 = vpop.permute.xlu0 %552
      %v555 = vmul.f32 %v553, %v495
      %v556 = vmul.f32 %v553, %v499
      %v557 = vmul.f32 %v553, %v503
      %v558 = vmul.f32 %v553, %v507
      %563 = vrot.lane.b32.xlu0 %v555, 108
      %v564 = vpop.permute.xlu0 %563
      %565 = vrot.lane.b32.xlu0 %v556, 108
      %v566 = vpop.permute.xlu0 %565
      %567 = vrot.lane.b32.xlu0 %v557, 108
      %v568 = vpop.permute.xlu0 %567
      %569 = vrot.lane.b32.xlu0 %v558, 108
      %v570 = vpop.permute.xlu0 %569
      %v571 = vsel %vm313, %v564, %v566
      %v572 = vsel %vm313, %v566, %v568
      %v573 = vsel %vm313, %v568, %v570
      %v578 = vadd.f32 %v547, %v571
      %v579 = vadd.f32 %v548, %v572
      %v580 = vadd.f32 %v549, %v573
      %v581 = vadd.f32 %v550, %v570
      %582 = vset.pattern.permute.xlu0 11
      %583 = vperm.xlu0 %582, %v226
      %v584 = vpop.permute.xlu0 %583
      %v586 = vmul.f32 %v584, %v495
      %v587 = vmul.f32 %v584, %v499
      %v588 = vmul.f32 %v584, %v503
      %v589 = vmul.f32 %v584, %v507
      %594 = vrot.lane.b32.xlu0 %v586, 107
      %v595 = vpop.permute.xlu0 %594
      %596 = vrot.lane.b32.xlu0 %v587, 107
      %v597 = vpop.permute.xlu0 %596
      %598 = vrot.lane.b32.xlu0 %v588, 107
      %v599 = vpop.permute.xlu0 %598
      %600 = vrot.lane.b32.xlu0 %v589, 107
      %v601 = vpop.permute.xlu0 %600
      %v602 = vsel %vm345, %v595, %v597
      %v603 = vsel %vm345, %v597, %v599
      %v604 = vsel %vm345, %v599, %v601
      %v609 = vadd.f32 %v578, %v602
      %v610 = vadd.f32 %v579, %v603
      %v611 = vadd.f32 %v580, %v604
      %v612 = vadd.f32 %v581, %v601
      %s613 = scalar_lea.vmem %s219, 3
      %v614 = vld [vmem:[%s613] ss:$8 sm:$0xf]
      %615 = vset.pattern.permute.xlu0 12
      %616 = vperm.xlu0 %615, %v226
      %v617 = vpop.permute.xlu0 %616
      %v620 = vlaneseq
      %v621 = vshrl.u32 %v620, 7
      %v622 = vsub.s32 0, %v621
      %v623 = vrot.slane %v614, %v622
      %v624 = vlaneseq
      %v625 = vshrl.u32 %v624, 7
      %v626 = vsub.s32 1, %v625
      %v627 = vrot.slane %v614, %v626
      %v628 = vlaneseq
      %v629 = vshrl.u32 %v628, 7
      %v630 = vsub.s32 2, %v629
      %v631 = vrot.slane %v614, %v630
      %v632 = vlaneseq
      %v633 = vshrl.u32 %v632, 7
      %v634 = vsub.s32 3, %v633
      %v635 = vrot.slane %v614, %v634
      %v640 = vmul.f32 %v617, %v623
      %v641 = vmul.f32 %v617, %v627
      %v642 = vmul.f32 %v617, %v631
      %v643 = vmul.f32 %v617, %v635
      %v644 = vadd.f32 %v609, %v640
      %v645 = vadd.f32 %v610, %v641
      %v646 = vadd.f32 %v611, %v642
      %v647 = vadd.f32 %v612, %v643
      %648 = vset.pattern.permute.xlu0 13
      %649 = vperm.xlu0 %648, %v226
      %v650 = vpop.permute.xlu0 %649
      %v652 = vmul.f32 %v650, %v623
      %v653 = vmul.f32 %v650, %v627
      %v654 = vmul.f32 %v650, %v631
      %v655 = vmul.f32 %v650, %v635
      %660 = vrot.lane.b32.xlu0 %v652, 127
      %v661 = vpop.permute.xlu0 %660
      %662 = vrot.lane.b32.xlu0 %v653, 127
      %v663 = vpop.permute.xlu0 %662
      %664 = vrot.lane.b32.xlu0 %v654, 127
      %v665 = vpop.permute.xlu0 %664
      %666 = vrot.lane.b32.xlu0 %v655, 127
      %v667 = vpop.permute.xlu0 %666
      %v668 = vsel %vm281, %v661, %v663
      %v669 = vsel %vm281, %v663, %v665
      %v670 = vsel %vm281, %v665, %v667
      %v675 = vadd.f32 %v644, %v668
      %v676 = vadd.f32 %v645, %v669
      %v677 = vadd.f32 %v646, %v670
      %v678 = vadd.f32 %v647, %v667
      %679 = vset.pattern.permute.xlu0 14
      %680 = vperm.xlu0 %679, %v226
      %v681 = vpop.permute.xlu0 %680
      %v683 = vmul.f32 %v681, %v623
      %v684 = vmul.f32 %v681, %v627
      %v685 = vmul.f32 %v681, %v631
      %v686 = vmul.f32 %v681, %v635
      %691 = vrot.lane.b32.xlu0 %v683, 108
      %v692 = vpop.permute.xlu0 %691
      %693 = vrot.lane.b32.xlu0 %v684, 108
      %v694 = vpop.permute.xlu0 %693
      %695 = vrot.lane.b32.xlu0 %v685, 108
      %v696 = vpop.permute.xlu0 %695
      %697 = vrot.lane.b32.xlu0 %v686, 108
      %v698 = vpop.permute.xlu0 %697
      %v699 = vsel %vm313, %v692, %v694
      %v700 = vsel %vm313, %v694, %v696
      %v701 = vsel %vm313, %v696, %v698
      %v706 = vadd.f32 %v675, %v699
      %v707 = vadd.f32 %v676, %v700
      %v708 = vadd.f32 %v677, %v701
      %v709 = vadd.f32 %v678, %v698
      %710 = vset.pattern.permute.xlu0 15
      %711 = vperm.xlu0 %710, %v226
      %v712 = vpop.permute.xlu0 %711
      %v714 = vmul.f32 %v712, %v623
      %v715 = vmul.f32 %v712, %v627
      %v716 = vmul.f32 %v712, %v631
      %v717 = vmul.f32 %v712, %v635
      %722 = vrot.lane.b32.xlu0 %v714, 107
      %v723 = vpop.permute.xlu0 %722
      %724 = vrot.lane.b32.xlu0 %v715, 107
      %v725 = vpop.permute.xlu0 %724
      %726 = vrot.lane.b32.xlu0 %v716, 107
      %v727 = vpop.permute.xlu0 %726
      %728 = vrot.lane.b32.xlu0 %v717, 107
      %v729 = vpop.permute.xlu0 %728
      %v730 = vsel %vm345, %v723, %v725
      %v731 = vsel %vm345, %v725, %v727
      %v732 = vsel %vm345, %v727, %v729
      %v737 = vadd.f32 %v706, %v730
      %v738 = vadd.f32 %v707, %v731
      %v739 = vadd.f32 %v708, %v732
      %v740 = vadd.f32 %v709, %v729
      %s741 = scalar_lea.vmem %s219, 4
      %v742 = vld [vmem:[%s741] ss:$8 sm:$0xf]
      %743 = vset.pattern.permute.xlu0 16
      %744 = vperm.xlu0 %743, %v226
      %v745 = vpop.permute.xlu0 %744
      %v748 = vlaneseq
      %v749 = vshrl.u32 %v748, 7
      %v750 = vsub.s32 0, %v749
      %v751 = vrot.slane %v742, %v750
      %v752 = vlaneseq
      %v753 = vshrl.u32 %v752, 7
      %v754 = vsub.s32 1, %v753
      %v755 = vrot.slane %v742, %v754
      %v756 = vlaneseq
      %v757 = vshrl.u32 %v756, 7
      %v758 = vsub.s32 2, %v757
      %v759 = vrot.slane %v742, %v758
      %v760 = vlaneseq
      %v761 = vshrl.u32 %v760, 7
      %v762 = vsub.s32 3, %v761
      %v763 = vrot.slane %v742, %v762
      %v768 = vmul.f32 %v745, %v751
      %v769 = vmul.f32 %v745, %v755
      %v770 = vmul.f32 %v745, %v759
      %v771 = vmul.f32 %v745, %v763
      %v772 = vadd.f32 %v737, %v768
      %v773 = vadd.f32 %v738, %v769
      %v774 = vadd.f32 %v739, %v770
      %v775 = vadd.f32 %v740, %v771
      %776 = vset.pattern.permute.xlu0 17
      %777 = vperm.xlu0 %776, %v226
      %v778 = vpop.permute.xlu0 %777
      %v780 = vmul.f32 %v778, %v751
      %v781 = vmul.f32 %v778, %v755
      %v782 = vmul.f32 %v778, %v759
      %v783 = vmul.f32 %v778, %v763
      %788 = vrot.lane.b32.xlu0 %v780, 127
      %v789 = vpop.permute.xlu0 %788
      %790 = vrot.lane.b32.xlu0 %v781, 127
      %v791 = vpop.permute.xlu0 %790
      %792 = vrot.lane.b32.xlu0 %v782, 127
      %v793 = vpop.permute.xlu0 %792
      %794 = vrot.lane.b32.xlu0 %v783, 127
      %v795 = vpop.permute.xlu0 %794
      %v796 = vsel %vm281, %v789, %v791
      %v797 = vsel %vm281, %v791, %v793
      %v798 = vsel %vm281, %v793, %v795
      %v803 = vadd.f32 %v772, %v796
      %v804 = vadd.f32 %v773, %v797
      %v805 = vadd.f32 %v774, %v798
      %v806 = vadd.f32 %v775, %v795
      %807 = vset.pattern.permute.xlu0 18
      %808 = vperm.xlu0 %807, %v226
      %v809 = vpop.permute.xlu0 %808
      %v811 = vmul.f32 %v809, %v751
      %v812 = vmul.f32 %v809, %v755
      %v813 = vmul.f32 %v809, %v759
      %v814 = vmul.f32 %v809, %v763
      %819 = vrot.lane.b32.xlu0 %v811, 108
      %v820 = vpop.permute.xlu0 %819
      %821 = vrot.lane.b32.xlu0 %v812, 108
      %v822 = vpop.permute.xlu0 %821
      %823 = vrot.lane.b32.xlu0 %v813, 108
      %v824 = vpop.permute.xlu0 %823
      %825 = vrot.lane.b32.xlu0 %v814, 108
      %v826 = vpop.permute.xlu0 %825
      %v827 = vsel %vm313, %v820, %v822
      %v828 = vsel %vm313, %v822, %v824
      %v829 = vsel %vm313, %v824, %v826
      %v834 = vadd.f32 %v803, %v827
      %v835 = vadd.f32 %v804, %v828
      %v836 = vadd.f32 %v805, %v829
      %v837 = vadd.f32 %v806, %v826
      %838 = vset.pattern.permute.xlu0 19
      %839 = vperm.xlu0 %838, %v226
      %v840 = vpop.permute.xlu0 %839
      %v842 = vmul.f32 %v840, %v751
      %v843 = vmul.f32 %v840, %v755
      %v844 = vmul.f32 %v840, %v759
      %v845 = vmul.f32 %v840, %v763
      %850 = vrot.lane.b32.xlu0 %v842, 107
      %v851 = vpop.permute.xlu0 %850
      %852 = vrot.lane.b32.xlu0 %v843, 107
      %v853 = vpop.permute.xlu0 %852
      %854 = vrot.lane.b32.xlu0 %v844, 107
      %v855 = vpop.permute.xlu0 %854
      %856 = vrot.lane.b32.xlu0 %v845, 107
      %v857 = vpop.permute.xlu0 %856
      %v858 = vsel %vm345, %v851, %v853
      %v859 = vsel %vm345, %v853, %v855
      %v860 = vsel %vm345, %v855, %v857
      %v865 = vadd.f32 %v834, %v858
      %v866 = vadd.f32 %v835, %v859
      %v867 = vadd.f32 %v836, %v860
      %v868 = vadd.f32 %v837, %v857
      %v869 = vld [vmem:[%s2] sm:$0x7f]
      %871 = vset.pattern.permute.xlu0 0
      %872 = vperm.xlu0 %871, %v869
      %v873 = vpop.permute.xlu0 %872
      %v875 = vadd.f32 %v865, %v873
      %v876 = vadd.f32 %v866, %v873
      %v877 = vadd.f32 %v867, %v873
      %v878 = vadd.f32 %v868, %v873
      %v879 = vmax.f32 %v875, 0.0
      %v880 = vmax.f32 %v876, 0.0
      %v881 = vmax.f32 %v877, 0.0
      %v882 = vmax.f32 %v878, 0.0
      %883 = vst [vmem:[#allocation2] sm:$0x7f] %v879
      %884 = vst [vmem:[#allocation2 + $0x8] sm:$0x7f] %v880
      %885 = vst [vmem:[#allocation2 + $0x10] sm:$0x7f] %v881
      %vm886 = vcmask 129024
      %887 = vst.msk [vmem:[#allocation2 + $0x18] sm:$0x7f] %vm886, %v882
      %vm888 = vcmask 301184
      %889 = vst.msk [vmem:[#allocation2 + $0x18] sm:$0x7f] %vm888, 0.0
      %v890 = vld [vmem:[#allocation2] ss:$8 sm:$0xf]
      %v891 = vld [vmem:[%s3] sm:$0xff]
      %v892 = vld [vmem:[%s3 + $0x8] sm:$0x1]
      %894 = vset.pattern.permute.xlu0 0
      %895 = vperm.xlu0 %894, %v891
      %v896 = vpop.permute.xlu0 %895
      %899 = vset.pattern.permute.xlu0 0
      %900 = vperm.xlu0 %899, %v892
      %v901 = vpop.permute.xlu0 %900
      %v904 = vlaneseq
      %v905 = vshrl.u32 %v904, 7
      %v906 = vsub.s32 0, %v905
      %v907 = vrot.slane %v890, %v906
      %v908 = vlaneseq
      %v909 = vshrl.u32 %v908, 7
      %v910 = vsub.s32 1, %v909
      %v911 = vrot.slane %v890, %v910
      %v912 = vlaneseq
      %v913 = vshrl.u32 %v912, 7
      %v914 = vsub.s32 2, %v913
      %v915 = vrot.slane %v890, %v914
      %v916 = vlaneseq
      %v917 = vshrl.u32 %v916, 7
      %v918 = vsub.s32 3, %v917
      %v919 = vrot.slane %v890, %v918
      %v924 = vmul.f32 %v896, %v907
      %v925 = vmul.f32 %v896, %v911
      %v926 = vmul.f32 %v896, %v915
      %v927 = vmul.f32 %v896, %v919
      %v928 = vmul.f32 %v901, %v907
      %v929 = vmul.f32 %v901, %v911
      %v930 = vmul.f32 %v901, %v915
      %v931 = vmul.f32 %v901, %v919
      %v932 = vadd.f32 %v924, 0.0
      %v933 = vadd.f32 %v925, 0.0
      %v934 = vadd.f32 %v926, 0.0
      %v935 = vadd.f32 %v927, 0.0
      %v936 = vadd.f32 %v928, 0.0
      %v937 = vadd.f32 %v929, 0.0
      %v938 = vadd.f32 %v930, 0.0
      %v939 = vadd.f32 %v931, 0.0
      %940 = vset.pattern.permute.xlu0 1
      %941 = vperm.xlu0 %940, %v891
      %v942 = vpop.permute.xlu0 %941
      %944 = vset.pattern.permute.xlu0 1
      %945 = vperm.xlu0 %944, %v892
      %v946 = vpop.permute.xlu0 %945
      %v948 = vmul.f32 %v942, %v907
      %v949 = vmul.f32 %v942, %v911
      %v950 = vmul.f32 %v942, %v915
      %v951 = vmul.f32 %v942, %v919
      %v952 = vmul.f32 %v946, %v907
      %v953 = vmul.f32 %v946, %v911
      %v954 = vmul.f32 %v946, %v915
      %v955 = vmul.f32 %v946, %v919
      %964 = vrot.lane.b32.xlu0 %v948, 127
      %v965 = vpop.permute.xlu0 %964
      %966 = vrot.lane.b32.xlu0 %v949, 127
      %v967 = vpop.permute.xlu0 %966
      %968 = vrot.lane.b32.xlu0 %v950, 127
      %v969 = vpop.permute.xlu0 %968
      %970 = vrot.lane.b32.xlu0 %v951, 127
      %v971 = vpop.permute.xlu0 %970
      %972 = vrot.lane.b32.xlu0 %v952, 127
      %v973 = vpop.permute.xlu0 %972
      %974 = vrot.lane.b32.xlu0 %v953, 127
      %v975 = vpop.permute.xlu0 %974
      %976 = vrot.lane.b32.xlu0 %v954, 127
      %v977 = vpop.permute.xlu0 %976
      %978 = vrot.lane.b32.xlu0 %v955, 127
      %v979 = vpop.permute.xlu0 %978
      %v980 = vsel %vm281, %v965, %v967
      %v981 = vsel %vm281, %v967, %v969
      %v982 = vsel %vm281, %v969, %v971
      %v983 = vsel %vm281, %v973, %v975
      %v984 = vsel %vm281, %v975, %v977
      %v985 = vsel %vm281, %v977, %v979
      %v994 = vadd.f32 %v932, %v980
      %v995 = vadd.f32 %v933, %v981
      %v996 = vadd.f32 %v934, %v982
      %v997 = vadd.f32 %v935, %v971
      %v998 = vadd.f32 %v936, %v983
      %v999 = vadd.f32 %v937, %v984
      %v1000 = vadd.f32 %v938, %v985
      %v1001 = vadd.f32 %v939, %v979
      %1002 = vset.pattern.permute.xlu0 2
      %1003 = vperm.xlu0 %1002, %v891
      %v1004 = vpop.permute.xlu0 %1003
      %1006 = vset.pattern.permute.xlu0 2
      %1007 = vperm.xlu0 %1006, %v892
      %v1008 = vpop.permute.xlu0 %1007
      %v1010 = vmul.f32 %v1004, %v907
      %v1011 = vmul.f32 %v1004, %v911
      %v1012 = vmul.f32 %v1004, %v915
      %v1013 = vmul.f32 %v1004, %v919
      %v1014 = vmul.f32 %v1008, %v907
      %v1015 = vmul.f32 %v1008, %v911
      %v1016 = vmul.f32 %v1008, %v915
      %v1017 = vmul.f32 %v1008, %v919
      %1026 = vrot.lane.b32.xlu0 %v1010, 108
      %v1027 = vpop.permute.xlu0 %1026
      %1028 = vrot.lane.b32.xlu0 %v1011, 108
      %v1029 = vpop.permute.xlu0 %1028
      %1030 = vrot.lane.b32.xlu0 %v1012, 108
      %v1031 = vpop.permute.xlu0 %1030
      %1032 = vrot.lane.b32.xlu0 %v1013, 108
      %v1033 = vpop.permute.xlu0 %1032
      %1034 = vrot.lane.b32.xlu0 %v1014, 108
      %v1035 = vpop.permute.xlu0 %1034
      %1036 = vrot.lane.b32.xlu0 %v1015, 108
      %v1037 = vpop.permute.xlu0 %1036
      %1038 = vrot.lane.b32.xlu0 %v1016, 108
      %v1039 = vpop.permute.xlu0 %1038
      %1040 = vrot.lane.b32.xlu0 %v1017, 108
      %v1041 = vpop.permute.xlu0 %1040
      %v1042 = vsel %vm313, %v1027, %v1029
      %v1043 = vsel %vm313, %v1029, %v1031
      %v1044 = vsel %vm313, %v1031, %v1033
      %v1045 = vsel %vm313, %v1035, %v1037
      %v1046 = vsel %vm313, %v1037, %v1039
      %v1047 = vsel %vm313, %v1039, %v1041
      %v1056 = vadd.f32 %v994, %v1042
      %v1057 = vadd.f32 %v995, %v1043
      %v1058 = vadd.f32 %v996, %v1044
      %v1059 = vadd.f32 %v997, %v1033
      %v1060 = vadd.f32 %v998, %v1045
      %v1061 = vadd.f32 %v999, %v1046
      %v1062 = vadd.f32 %v1000, %v1047
      %v1063 = vadd.f32 %v1001, %v1041
      %1064 = vset.pattern.permute.xlu0 3
      %1065 = vperm.xlu0 %1064, %v891
      %v1066 = vpop.permute.xlu0 %1065
      %1068 = vset.pattern.permute.xlu0 3
      %1069 = vperm.xlu0 %1068, %v892
      %v1070 = vpop.permute.xlu0 %1069
      %v1072 = vmul.f32 %v1066, %v907
      %v1073 = vmul.f32 %v1066, %v911
      %v1074 = vmul.f32 %v1066, %v915
      %v1075 = vmul.f32 %v1066, %v919
      %v1076 = vmul.f32 %v1070, %v907
      %v1077 = vmul.f32 %v1070, %v911
      %v1078 = vmul.f32 %v1070, %v915
      %v1079 = vmul.f32 %v1070, %v919
      %1088 = vrot.lane.b32.xlu0 %v1072, 107
      %v1089 = vpop.permute.xlu0 %1088
      %1090 = vrot.lane.b32.xlu0 %v1073, 107
      %v1091 = vpop.permute.xlu0 %1090
      %1092 = vrot.lane.b32.xlu0 %v1074, 107
      %v1093 = vpop.permute.xlu0 %1092
      %1094 = vrot.lane.b32.xlu0 %v1075, 107
      %v1095 = vpop.permute.xlu0 %1094
      %1096 = vrot.lane.b32.xlu0 %v1076, 107
      %v1097 = vpop.permute.xlu0 %1096
      %1098 = vrot.lane.b32.xlu0 %v1077, 107
      %v1099 = vpop.permute.xlu0 %1098
      %1100 = vrot.lane.b32.xlu0 %v1078, 107
      %v1101 = vpop.permute.xlu0 %1100
      %1102 = vrot.lane.b32.xlu0 %v1079, 107
      %v1103 = vpop.permute.xlu0 %1102
      %v1104 = vsel %vm345, %v1089, %v1091
      %v1105 = vsel %vm345, %v1091, %v1093
      %v1106 = vsel %vm345, %v1093, %v1095
      %v1107 = vsel %vm345, %v1097, %v1099
      %v1108 = vsel %vm345, %v1099, %v1101
      %v1109 = vsel %vm345, %v1101, %v1103
      %v1118 = vadd.f32 %v1056, %v1104
      %v1119 = vadd.f32 %v1057, %v1105
      %v1120 = vadd.f32 %v1058, %v1106
      %v1121 = vadd.f32 %v1059, %v1095
      %v1122 = vadd.f32 %v1060, %v1107
      %v1123 = vadd.f32 %v1061, %v1108
      %v1124 = vadd.f32 %v1062, %v1109
      %v1125 = vadd.f32 %v1063, %v1103
      %s1126 = scalar_lea.vmem [#allocation2], 1
      %v1127 = vld [vmem:[%s1126] ss:$8 sm:$0xf]
      %1128 = vset.pattern.permute.xlu0 4
      %1129 = vperm.xlu0 %1128, %v891
      %v1130 = vpop.permute.xlu0 %1129
      %1132 = vset.pattern.permute.xlu0 4
      %1133 = vperm.xlu0 %1132, %v892
      %v1134 = vpop.permute.xlu0 %1133
      %v1137 = vlaneseq
      %v1138 = vshrl.u32 %v1137, 7
      %v1139 = vsub.s32 0, %v1138
      %v1140 = vrot.slane %v1127, %v1139
      %v1141 = vlaneseq
      %v1142 = vshrl.u32 %v1141, 7
      %v1143 = vsub.s32 1, %v1142
      %v1144 = vrot.slane %v1127, %v1143
      %v1145 = vlaneseq
      %v1146 = vshrl.u32 %v1145, 7
      %v1147 = vsub.s32 2, %v1146
      %v1148 = vrot.slane %v1127, %v1147
      %v1149 = vlaneseq
      %v1150 = vshrl.u32 %v1149, 7
      %v1151 = vsub.s32 3, %v1150
      %v1152 = vrot.slane %v1127, %v1151
      %v1157 = vmul.f32 %v1130, %v1140
      %v1158 = vmul.f32 %v1130, %v1144
      %v1159 = vmul.f32 %v1130, %v1148
      %v1160 = vmul.f32 %v1130, %v1152
      %v1161 = vmul.f32 %v1134, %v1140
      %v1162 = vmul.f32 %v1134, %v1144
      %v1163 = vmul.f32 %v1134, %v1148
      %v1164 = vmul.f32 %v1134, %v1152
      %v1165 = vadd.f32 %v1118, %v1157
      %v1166 = vadd.f32 %v1119, %v1158
      %v1167 = vadd.f32 %v1120, %v1159
      %v1168 = vadd.f32 %v1121, %v1160
      %v1169 = vadd.f32 %v1122, %v1161
      %v1170 = vadd.f32 %v1123, %v1162
      %v1171 = vadd.f32 %v1124, %v1163
      %v1172 = vadd.f32 %v1125, %v1164
      %1173 = vset.pattern.permute.xlu0 5
      %1174 = vperm.xlu0 %1173, %v891
      %v1175 = vpop.permute.xlu0 %1174
      %1177 = vset.pattern.permute.xlu0 5
      %1178 = vperm.xlu0 %1177, %v892
      %v1179 = vpop.permute.xlu0 %1178
      %v1181 = vmul.f32 %v1175, %v1140
      %v1182 = vmul.f32 %v1175, %v1144
      %v1183 = vmul.f32 %v1175, %v1148
      %v1184 = vmul.f32 %v1175, %v1152
      %v1185 = vmul.f32 %v1179, %v1140
      %v1186 = vmul.f32 %v1179, %v1144
      %v1187 = vmul.f32 %v1179, %v1148
      %v1188 = vmul.f32 %v1179, %v1152
      %1197 = vrot.lane.b32.xlu0 %v1181, 127
      %v1198 = vpop.permute.xlu0 %1197
      %1199 = vrot.lane.b32.xlu0 %v1182, 127
      %v1200 = vpop.permute.xlu0 %1199
      %1201 = vrot.lane.b32.xlu0 %v1183, 127
      %v1202 = vpop.permute.xlu0 %1201
      %1203 = vrot.lane.b32.xlu0 %v1184, 127
      %v1204 = vpop.permute.xlu0 %1203
      %1205 = vrot.lane.b32.xlu0 %v1185, 127
      %v1206 = vpop.permute.xlu0 %1205
      %1207 = vrot.lane.b32.xlu0 %v1186, 127
      %v1208 = vpop.permute.xlu0 %1207
      %1209 = vrot.lane.b32.xlu0 %v1187, 127
      %v1210 = vpop.permute.xlu0 %1209
      %1211 = vrot.lane.b32.xlu0 %v1188, 127
      %v1212 = vpop.permute.xlu0 %1211
      %v1213 = vsel %vm281, %v1198, %v1200
      %v1214 = vsel %vm281, %v1200, %v1202
      %v1215 = vsel %vm281, %v1202, %v1204
      %v1216 = vsel %vm281, %v1206, %v1208
      %v1217 = vsel %vm281, %v1208, %v1210
      %v1218 = vsel %vm281, %v1210, %v1212
      %v1227 = vadd.f32 %v1165, %v1213
      %v1228 = vadd.f32 %v1166, %v1214
      %v1229 = vadd.f32 %v1167, %v1215
      %v1230 = vadd.f32 %v1168, %v1204
      %v1231 = vadd.f32 %v1169, %v1216
      %v1232 = vadd.f32 %v1170, %v1217
      %v1233 = vadd.f32 %v1171, %v1218
      %v1234 = vadd.f32 %v1172, %v1212
      %1235 = vset.pattern.permute.xlu0 6
      %1236 = vperm.xlu0 %1235, %v891
      %v1237 = vpop.permute.xlu0 %1236
      %1239 = vset.pattern.permute.xlu0 6
      %1240 = vperm.xlu0 %1239, %v892
      %v1241 = vpop.permute.xlu0 %1240
      %v1243 = vmul.f32 %v1237, %v1140
      %v1244 = vmul.f32 %v1237, %v1144
      %v1245 = vmul.f32 %v1237, %v1148
      %v1246 = vmul.f32 %v1237, %v1152
      %v1247 = vmul.f32 %v1241, %v1140
      %v1248 = vmul.f32 %v1241, %v1144
      %v1249 = vmul.f32 %v1241, %v1148
      %v1250 = vmul.f32 %v1241, %v1152
      %1259 = vrot.lane.b32.xlu0 %v1243, 108
      %v1260 = vpop.permute.xlu0 %1259
      %1261 = vrot.lane.b32.xlu0 %v1244, 108
      %v1262 = vpop.permute.xlu0 %1261
      %1263 = vrot.lane.b32.xlu0 %v1245, 108
      %v1264 = vpop.permute.xlu0 %1263
      %1265 = vrot.lane.b32.xlu0 %v1246, 108
      %v1266 = vpop.permute.xlu0 %1265
      %1267 = vrot.lane.b32.xlu0 %v1247, 108
      %v1268 = vpop.permute.xlu0 %1267
      %1269 = vrot.lane.b32.xlu0 %v1248, 108
      %v1270 = vpop.permute.xlu0 %1269
      %1271 = vrot.lane.b32.xlu0 %v1249, 108
      %v1272 = vpop.permute.xlu0 %1271
      %1273 = vrot.lane.b32.xlu0 %v1250, 108
      %v1274 = vpop.permute.xlu0 %1273
      %v1275 = vsel %vm313, %v1260, %v1262
      %v1276 = vsel %vm313, %v1262, %v1264
      %v1277 = vsel %vm313, %v1264, %v1266
      %v1278 = vsel %vm313, %v1268, %v1270
      %v1279 = vsel %vm313, %v1270, %v1272
      %v1280 = vsel %vm313, %v1272, %v1274
      %v1289 = vadd.f32 %v1227, %v1275
      %v1290 = vadd.f32 %v1228, %v1276
      %v1291 = vadd.f32 %v1229, %v1277
      %v1292 = vadd.f32 %v1230, %v1266
      %v1293 = vadd.f32 %v1231, %v1278
      %v1294 = vadd.f32 %v1232, %v1279
      %v1295 = vadd.f32 %v1233, %v1280
      %v1296 = vadd.f32 %v1234, %v1274
      %1297 = vset.pattern.permute.xlu0 7
      %1298 = vperm.xlu0 %1297, %v891
      %v1299 = vpop.permute.xlu0 %1298
      %1301 = vset.pattern.permute.xlu0 7
      %1302 = vperm.xlu0 %1301, %v892
      %v1303 = vpop.permute.xlu0 %1302
      %v1305 = vmul.f32 %v1299, %v1140
      %v1306 = vmul.f32 %v1299, %v1144
      %v1307 = vmul.f32 %v1299, %v1148
      %v1308 = vmul.f32 %v1299, %v1152
      %v1309 = vmul.f32 %v1303, %v1140
      %v1310 = vmul.f32 %v1303, %v1144
      %v1311 = vmul.f32 %v1303, %v1148
      %v1312 = vmul.f32 %v1303, %v1152
      %1321 = vrot.lane.b32.xlu0 %v1305, 107
      %v1322 = vpop.permute.xlu0 %1321
      %1323 = vrot.lane.b32.xlu0 %v1306, 107
      %v1324 = vpop.permute.xlu0 %1323
      %1325 = vrot.lane.b32.xlu0 %v1307, 107
      %v1326 = vpop.permute.xlu0 %1325
      %1327 = vrot.lane.b32.xlu0 %v1308, 107
      %v1328 = vpop.permute.xlu0 %1327
      %1329 = vrot.lane.b32.xlu0 %v1309, 107
      %v1330 = vpop.permute.xlu0 %1329
      %1331 = vrot.lane.b32.xlu0 %v1310, 107
      %v1332 = vpop.permute.xlu0 %1331
      %1333 = vrot.lane.b32.xlu0 %v1311, 107
      %v1334 = vpop.permute.xlu0 %1333
      %1335 = vrot.lane.b32.xlu0 %v1312, 107
      %v1336 = vpop.permute.xlu0 %1335
      %v1337 = vsel %vm345, %v1322, %v1324
      %v1338 = vsel %vm345, %v1324, %v1326
      %v1339 = vsel %vm345, %v1326, %v1328
      %v1340 = vsel %vm345, %v1330, %v1332
      %v1341 = vsel %vm345, %v1332, %v1334
      %v1342 = vsel %vm345, %v1334, %v1336
      %v1351 = vadd.f32 %v1289, %v1337
      %v1352 = vadd.f32 %v1290, %v1338
      %v1353 = vadd.f32 %v1291, %v1339
      %v1354 = vadd.f32 %v1292, %v1328
      %v1355 = vadd.f32 %v1293, %v1340
      %v1356 = vadd.f32 %v1294, %v1341
      %v1357 = vadd.f32 %v1295, %v1342
      %v1358 = vadd.f32 %v1296, %v1336
      %s1359 = scalar_lea.vmem [#allocation2], 2
      %v1360 = vld [vmem:[%s1359] ss:$8 sm:$0xf]
      %1361 = vset.pattern.permute.xlu0 8
      %1362 = vperm.xlu0 %1361, %v891
      %v1363 = vpop.permute.xlu0 %1362
      %1365 = vset.pattern.permute.xlu0 8
      %1366 = vperm.xlu0 %1365, %v892
      %v1367 = vpop.permute.xlu0 %1366
      %v1370 = vlaneseq
      %v1371 = vshrl.u32 %v1370, 7
      %v1372 = vsub.s32 0, %v1371
      %v1373 = vrot.slane %v1360, %v1372
      %v1374 = vlaneseq
      %v1375 = vshrl.u32 %v1374, 7
      %v1376 = vsub.s32 1, %v1375
      %v1377 = vrot.slane %v1360, %v1376
      %v1378 = vlaneseq
      %v1379 = vshrl.u32 %v1378, 7
      %v1380 = vsub.s32 2, %v1379
      %v1381 = vrot.slane %v1360, %v1380
      %v1382 = vlaneseq
      %v1383 = vshrl.u32 %v1382, 7
      %v1384 = vsub.s32 3, %v1383
      %v1385 = vrot.slane %v1360, %v1384
      %v1390 = vmul.f32 %v1363, %v1373
      %v1391 = vmul.f32 %v1363, %v1377
      %v1392 = vmul.f32 %v1363, %v1381
      %v1393 = vmul.f32 %v1363, %v1385
      %v1394 = vmul.f32 %v1367, %v1373
      %v1395 = vmul.f32 %v1367, %v1377
      %v1396 = vmul.f32 %v1367, %v1381
      %v1397 = vmul.f32 %v1367, %v1385
      %v1398 = vadd.f32 %v1351, %v1390
      %v1399 = vadd.f32 %v1352, %v1391
      %v1400 = vadd.f32 %v1353, %v1392
      %v1401 = vadd.f32 %v1354, %v1393
      %v1402 = vadd.f32 %v1355, %v1394
      %v1403 = vadd.f32 %v1356, %v1395
      %v1404 = vadd.f32 %v1357, %v1396
      %v1405 = vadd.f32 %v1358, %v1397
      %1406 = vset.pattern.permute.xlu0 9
      %1407 = vperm.xlu0 %1406, %v891
      %v1408 = vpop.permute.xlu0 %1407
      %1410 = vset.pattern.permute.xlu0 9
      %1411 = vperm.xlu0 %1410, %v892
      %v1412 = vpop.permute.xlu0 %1411
      %v1414 = vmul.f32 %v1408, %v1373
      %v1415 = vmul.f32 %v1408, %v1377
      %v1416 = vmul.f32 %v1408, %v1381
      %v1417 = vmul.f32 %v1408, %v1385
      %v1418 = vmul.f32 %v1412, %v1373
      %v1419 = vmul.f32 %v1412, %v1377
      %v1420 = vmul.f32 %v1412, %v1381
      %v1421 = vmul.f32 %v1412, %v1385
      %1430 = vrot.lane.b32.xlu0 %v1414, 127
      %v1431 = vpop.permute.xlu0 %1430
      %1432 = vrot.lane.b32.xlu0 %v1415, 127
      %v1433 = vpop.permute.xlu0 %1432
      %1434 = vrot.lane.b32.xlu0 %v1416, 127
      %v1435 = vpop.permute.xlu0 %1434
      %1436 = vrot.lane.b32.xlu0 %v1417, 127
      %v1437 = vpop.permute.xlu0 %1436
      %1438 = vrot.lane.b32.xlu0 %v1418, 127
      %v1439 = vpop.permute.xlu0 %1438
      %1440 = vrot.lane.b32.xlu0 %v1419, 127
      %v1441 = vpop.permute.xlu0 %1440
      %1442 = vrot.lane.b32.xlu0 %v1420, 127
      %v1443 = vpop.permute.xlu0 %1442
      %1444 = vrot.lane.b32.xlu0 %v1421, 127
      %v1445 = vpop.permute.xlu0 %1444
      %v1446 = vsel %vm281, %v1431, %v1433
      %v1447 = vsel %vm281, %v1433, %v1435
      %v1448 = vsel %vm281, %v1435, %v1437
      %v1449 = vsel %vm281, %v1439, %v1441
      %v1450 = vsel %vm281, %v1441, %v1443
      %v1451 = vsel %vm281, %v1443, %v1445
      %v1460 = vadd.f32 %v1398, %v1446
      %v1461 = vadd.f32 %v1399, %v1447
      %v1462 = vadd.f32 %v1400, %v1448
      %v1463 = vadd.f32 %v1401, %v1437
      %v1464 = vadd.f32 %v1402, %v1449
      %v1465 = vadd.f32 %v1403, %v1450
      %v1466 = vadd.f32 %v1404, %v1451
      %v1467 = vadd.f32 %v1405, %v1445
      %1468 = vset.pattern.permute.xlu0 10
      %1469 = vperm.xlu0 %1468, %v891
      %v1470 = vpop.permute.xlu0 %1469
      %1472 = vset.pattern.permute.xlu0 10
      %1473 = vperm.xlu0 %1472, %v892
      %v1474 = vpop.permute.xlu0 %1473
      %v1476 = vmul.f32 %v1470, %v1373
      %v1477 = vmul.f32 %v1470, %v1377
      %v1478 = vmul.f32 %v1470, %v1381
      %v1479 = vmul.f32 %v1470, %v1385
      %v1480 = vmul.f32 %v1474, %v1373
      %v1481 = vmul.f32 %v1474, %v1377
      %v1482 = vmul.f32 %v1474, %v1381
      %v1483 = vmul.f32 %v1474, %v1385
      %1492 = vrot.lane.b32.xlu0 %v1476, 108
      %v1493 = vpop.permute.xlu0 %1492
      %1494 = vrot.lane.b32.xlu0 %v1477, 108
      %v1495 = vpop.permute.xlu0 %1494
      %1496 = vrot.lane.b32.xlu0 %v1478, 108
      %v1497 = vpop.permute.xlu0 %1496
      %1498 = vrot.lane.b32.xlu0 %v1479, 108
      %v1499 = vpop.permute.xlu0 %1498
      %1500 = vrot.lane.b32.xlu0 %v1480, 108
      %v1501 = vpop.permute.xlu0 %1500
      %1502 = vrot.lane.b32.xlu0 %v1481, 108
      %v1503 = vpop.permute.xlu0 %1502
      %1504 = vrot.lane.b32.xlu0 %v1482, 108
      %v1505 = vpop.permute.xlu0 %1504
      %1506 = vrot.lane.b32.xlu0 %v1483, 108
      %v1507 = vpop.permute.xlu0 %1506
      %v1508 = vsel %vm313, %v1493, %v1495
      %v1509 = vsel %vm313, %v1495, %v1497
      %v1510 = vsel %vm313, %v1497, %v1499
      %v1511 = vsel %vm313, %v1501, %v1503
      %v1512 = vsel %vm313, %v1503, %v1505
      %v1513 = vsel %vm313, %v1505, %v1507
      %v1522 = vadd.f32 %v1460, %v1508
      %v1523 = vadd.f32 %v1461, %v1509
      %v1524 = vadd.f32 %v1462, %v1510
      %v1525 = vadd.f32 %v1463, %v1499
      %v1526 = vadd.f32 %v1464, %v1511
      %v1527 = vadd.f32 %v1465, %v1512
      %v1528 = vadd.f32 %v1466, %v1513
      %v1529 = vadd.f32 %v1467, %v1507
      %1530 = vset.pattern.permute.xlu0 11
      %1531 = vperm.xlu0 %1530, %v891
      %v1532 = vpop.permute.xlu0 %1531
      %1534 = vset.pattern.permute.xlu0 11
      %1535 = vperm.xlu0 %1534, %v892
      %v1536 = vpop.permute.xlu0 %1535
      %v1538 = vmul.f32 %v1532, %v1373
      %v1539 = vmul.f32 %v1532, %v1377
      %v1540 = vmul.f32 %v1532, %v1381
      %v1541 = vmul.f32 %v1532, %v1385
      %v1542 = vmul.f32 %v1536, %v1373
      %v1543 = vmul.f32 %v1536, %v1377
      %v1544 = vmul.f32 %v1536, %v1381
      %v1545 = vmul.f32 %v1536, %v1385
      %1554 = vrot.lane.b32.xlu0 %v1538, 107
      %v1555 = vpop.permute.xlu0 %1554
      %1556 = vrot.lane.b32.xlu0 %v1539, 107
      %v1557 = vpop.permute.xlu0 %1556
      %1558 = vrot.lane.b32.xlu0 %v1540, 107
      %v1559 = vpop.permute.xlu0 %1558
      %1560 = vrot.lane.b32.xlu0 %v1541, 107
      %v1561 = vpop.permute.xlu0 %1560
      %1562 = vrot.lane.b32.xlu0 %v1542, 107
      %v1563 = vpop.permute.xlu0 %1562
      %1564 = vrot.lane.b32.xlu0 %v1543, 107
      %v1565 = vpop.permute.xlu0 %1564
      %1566 = vrot.lane.b32.xlu0 %v1544, 107
      %v1567 = vpop.permute.xlu0 %1566
      %1568 = vrot.lane.b32.xlu0 %v1545, 107
      %v1569 = vpop.permute.xlu0 %1568
      %v1570 = vsel %vm345, %v1555, %v1557
      %v1571 = vsel %vm345, %v1557, %v1559
      %v1572 = vsel %vm345, %v1559, %v1561
      %v1573 = vsel %vm345, %v1563, %v1565
      %v1574 = vsel %vm345, %v1565, %v1567
      %v1575 = vsel %vm345, %v1567, %v1569
      %v1584 = vadd.f32 %v1522, %v1570
      %v1585 = vadd.f32 %v1523, %v1571
      %v1586 = vadd.f32 %v1524, %v1572
      %v1587 = vadd.f32 %v1525, %v1561
      %v1588 = vadd.f32 %v1526, %v1573
      %v1589 = vadd.f32 %v1527, %v1574
      %v1590 = vadd.f32 %v1528, %v1575
      %v1591 = vadd.f32 %v1529, %v1569
      %s1592 = scalar_lea.vmem [#allocation2], 3
      %v1593 = vld [vmem:[%s1592] ss:$8 sm:$0xf]
      %1594 = vset.pattern.permute.xlu0 12
      %1595 = vperm.xlu0 %1594, %v891
      %v1596 = vpop.permute.xlu0 %1595
      %1598 = vset.pattern.permute.xlu0 12
      %1599 = vperm.xlu0 %1598, %v892
      %v1600 = vpop.permute.xlu0 %1599
      %v1603 = vlaneseq
      %v1604 = vshrl.u32 %v1603, 7
      %v1605 = vsub.s32 0, %v1604
      %v1606 = vrot.slane %v1593, %v1605
      %v1607 = vlaneseq
      %v1608 = vshrl.u32 %v1607, 7
      %v1609 = vsub.s32 1, %v1608
      %v1610 = vrot.slane %v1593, %v1609
      %v1611 = vlaneseq
      %v1612 = vshrl.u32 %v1611, 7
      %v1613 = vsub.s32 2, %v1612
      %v1614 = vrot.slane %v1593, %v1613
      %v1615 = vlaneseq
      %v1616 = vshrl.u32 %v1615, 7
      %v1617 = vsub.s32 3, %v1616
      %v1618 = vrot.slane %v1593, %v1617
      %v1623 = vmul.f32 %v1596, %v1606
      %v1624 = vmul.f32 %v1596, %v1610
      %v1625 = vmul.f32 %v1596, %v1614
      %v1626 = vmul.f32 %v1596, %v1618
      %v1627 = vmul.f32 %v1600, %v1606
      %v1628 = vmul.f32 %v1600, %v1610
      %v1629 = vmul.f32 %v1600, %v1614
      %v1630 = vmul.f32 %v1600, %v1618
      %v1631 = vadd.f32 %v1584, %v1623
      %v1632 = vadd.f32 %v1585, %v1624
      %v1633 = vadd.f32 %v1586, %v1625
      %v1634 = vadd.f32 %v1587, %v1626
      %v1635 = vadd.f32 %v1588, %v1627
      %v1636 = vadd.f32 %v1589, %v1628
      %v1637 = vadd.f32 %v1590, %v1629
      %v1638 = vadd.f32 %v1591, %v1630
      %1639 = vset.pattern.permute.xlu0 13
      %1640 = vperm.xlu0 %1639, %v891
      %v1641 = vpop.permute.xlu0 %1640
      %1643 = vset.pattern.permute.xlu0 13
      %1644 = vperm.xlu0 %1643, %v892
      %v1645 = vpop.permute.xlu0 %1644
      %v1647 = vmul.f32 %v1641, %v1606
      %v1648 = vmul.f32 %v1641, %v1610
      %v1649 = vmul.f32 %v1641, %v1614
      %v1650 = vmul.f32 %v1641, %v1618
      %v1651 = vmul.f32 %v1645, %v1606
      %v1652 = vmul.f32 %v1645, %v1610
      %v1653 = vmul.f32 %v1645, %v1614
      %v1654 = vmul.f32 %v1645, %v1618
      %1663 = vrot.lane.b32.xlu0 %v1647, 127
      %v1664 = vpop.permute.xlu0 %1663
      %1665 = vrot.lane.b32.xlu0 %v1648, 127
      %v1666 = vpop.permute.xlu0 %1665
      %1667 = vrot.lane.b32.xlu0 %v1649, 127
      %v1668 = vpop.permute.xlu0 %1667
      %1669 = vrot.lane.b32.xlu0 %v1650, 127
      %v1670 = vpop.permute.xlu0 %1669
      %1671 = vrot.lane.b32.xlu0 %v1651, 127
      %v1672 = vpop.permute.xlu0 %1671
      %1673 = vrot.lane.b32.xlu0 %v1652, 127
      %v1674 = vpop.permute.xlu0 %1673
      %1675 = vrot.lane.b32.xlu0 %v1653, 127
      %v1676 = vpop.permute.xlu0 %1675
      %1677 = vrot.lane.b32.xlu0 %v1654, 127
      %v1678 = vpop.permute.xlu0 %1677
      %v1679 = vsel %vm281, %v1664, %v1666
      %v1680 = vsel %vm281, %v1666, %v1668
      %v1681 = vsel %vm281, %v1668, %v1670
      %v1682 = vsel %vm281, %v1672, %v1674
      %v1683 = vsel %vm281, %v1674, %v1676
      %v1684 = vsel %vm281, %v1676, %v1678
      %v1693 = vadd.f32 %v1631, %v1679
      %v1694 = vadd.f32 %v1632, %v1680
      %v1695 = vadd.f32 %v1633, %v1681
      %v1696 = vadd.f32 %v1634, %v1670
      %v1697 = vadd.f32 %v1635, %v1682
      %v1698 = vadd.f32 %v1636, %v1683
      %v1699 = vadd.f32 %v1637, %v1684
      %v1700 = vadd.f32 %v1638, %v1678
      %1701 = vset.pattern.permute.xlu0 14
      %1702 = vperm.xlu0 %1701, %v891
      %v1703 = vpop.permute.xlu0 %1702
      %1705 = vset.pattern.permute.xlu0 14
      %1706 = vperm.xlu0 %1705, %v892
      %v1707 = vpop.permute.xlu0 %1706
      %v1709 = vmul.f32 %v1703, %v1606
      %v1710 = vmul.f32 %v1703, %v1610
      %v1711 = vmul.f32 %v1703, %v1614
      %v1712 = vmul.f32 %v1703, %v1618
      %v1713 = vmul.f32 %v1707, %v1606
      %v1714 = vmul.f32 %v1707, %v1610
      %v1715 = vmul.f32 %v1707, %v1614
      %v1716 = vmul.f32 %v1707, %v1618
      %1725 = vrot.lane.b32.xlu0 %v1709, 108
      %v1726 = vpop.permute.xlu0 %1725
      %1727 = vrot.lane.b32.xlu0 %v1710, 108
      %v1728 = vpop.permute.xlu0 %1727
      %1729 = vrot.lane.b32.xlu0 %v1711, 108
      %v1730 = vpop.permute.xlu0 %1729
      %1731 = vrot.lane.b32.xlu0 %v1712, 108
      %v1732 = vpop.permute.xlu0 %1731
      %1733 = vrot.lane.b32.xlu0 %v1713, 108
      %v1734 = vpop.permute.xlu0 %1733
      %1735 = vrot.lane.b32.xlu0 %v1714, 108
      %v1736 = vpop.permute.xlu0 %1735
      %1737 = vrot.lane.b32.xlu0 %v1715, 108
      %v1738 = vpop.permute.xlu0 %1737
      %1739 = vrot.lane.b32.xlu0 %v1716, 108
      %v1740 = vpop.permute.xlu0 %1739
      %v1741 = vsel %vm313, %v1726, %v1728
      %v1742 = vsel %vm313, %v1728, %v1730
      %v1743 = vsel %vm313, %v1730, %v1732
      %v1744 = vsel %vm313, %v1734, %v1736
      %v1745 = vsel %vm313, %v1736, %v1738
      %v1746 = vsel %vm313, %v1738, %v1740
      %v1755 = vadd.f32 %v1693, %v1741
      %v1756 = vadd.f32 %v1694, %v1742
      %v1757 = vadd.f32 %v1695, %v1743
      %v1758 = vadd.f32 %v1696, %v1732
      %v1759 = vadd.f32 %v1697, %v1744
      %v1760 = vadd.f32 %v1698, %v1745
      %v1761 = vadd.f32 %v1699, %v1746
      %v1762 = vadd.f32 %v1700, %v1740
      %1763 = vset.pattern.permute.xlu0 15
      %1764 = vperm.xlu0 %1763, %v891
      %v1765 = vpop.permute.xlu0 %1764
      %1767 = vset.pattern.permute.xlu0 15
      %1768 = vperm.xlu0 %1767, %v892
      %v1769 = vpop.permute.xlu0 %1768
      %v1771 = vmul.f32 %v1765, %v1606
      %v1772 = vmul.f32 %v1765, %v1610
      %v1773 = vmul.f32 %v1765, %v1614
      %v1774 = vmul.f32 %v1765, %v1618
      %v1775 = vmul.f32 %v1769, %v1606
      %v1776 = vmul.f32 %v1769, %v1610
      %v1777 = vmul.f32 %v1769, %v1614
      %v1778 = vmul.f32 %v1769, %v1618
      %1787 = vrot.lane.b32.xlu0 %v1771, 107
      %v1788 = vpop.permute.xlu0 %1787
      %1789 = vrot.lane.b32.xlu0 %v1772, 107
      %v1790 = vpop.permute.xlu0 %1789
      %1791 = vrot.lane.b32.xlu0 %v1773, 107
      %v1792 = vpop.permute.xlu0 %1791
      %1793 = vrot.lane.b32.xlu0 %v1774, 107
      %v1794 = vpop.permute.xlu0 %1793
      %1795 = vrot.lane.b32.xlu0 %v1775, 107
      %v1796 = vpop.permute.xlu0 %1795
      %1797 = vrot.lane.b32.xlu0 %v1776, 107
      %v1798 = vpop.permute.xlu0 %1797
      %1799 = vrot.lane.b32.xlu0 %v1777, 107
      %v1800 = vpop.permute.xlu0 %1799
      %1801 = vrot.lane.b32.xlu0 %v1778, 107
      %v1802 = vpop.permute.xlu0 %1801
      %v1803 = vsel %vm345, %v1788, %v1790
      %v1804 = vsel %vm345, %v1790, %v1792
      %v1805 = vsel %vm345, %v1792, %v1794
      %v1806 = vsel %vm345, %v1796, %v1798
      %v1807 = vsel %vm345, %v1798, %v1800
      %v1808 = vsel %vm345, %v1800, %v1802
      %v1817 = vadd.f32 %v1755, %v1803
      %v1818 = vadd.f32 %v1756, %v1804
      %v1819 = vadd.f32 %v1757, %v1805
      %v1820 = vadd.f32 %v1758, %v1794
      %v1821 = vadd.f32 %v1759, %v1806
      %v1822 = vadd.f32 %v1760, %v1807
      %v1823 = vadd.f32 %v1761, %v1808
      %v1824 = vadd.f32 %v1762, %v1802
      %s1825 = scalar_lea.vmem [#allocation2], 4
      %v1826 = vld [vmem:[%s1825] ss:$8 sm:$0xf]
      %1827 = vset.pattern.permute.xlu0 16
      %1828 = vperm.xlu0 %1827, %v891
      %v1829 = vpop.permute.xlu0 %1828
      %1831 = vset.pattern.permute.xlu0 16
      %1832 = vperm.xlu0 %1831, %v892
      %v1833 = vpop.permute.xlu0 %1832
      %v1836 = vlaneseq
      %v1837 = vshrl.u32 %v1836, 7
      %v1838 = vsub.s32 0, %v1837
      %v1839 = vrot.slane %v1826, %v1838
      %v1840 = vlaneseq
      %v1841 = vshrl.u32 %v1840, 7
      %v1842 = vsub.s32 1, %v1841
      %v1843 = vrot.slane %v1826, %v1842
      %v1844 = vlaneseq
      %v1845 = vshrl.u32 %v1844, 7
      %v1846 = vsub.s32 2, %v1845
      %v1847 = vrot.slane %v1826, %v1846
      %v1848 = vlaneseq
      %v1849 = vshrl.u32 %v1848, 7
      %v1850 = vsub.s32 3, %v1849
      %v1851 = vrot.slane %v1826, %v1850
      %v1856 = vmul.f32 %v1829, %v1839
      %v1857 = vmul.f32 %v1829, %v1843
      %v1858 = vmul.f32 %v1829, %v1847
      %v1859 = vmul.f32 %v1829, %v1851
      %v1860 = vmul.f32 %v1833, %v1839
      %v1861 = vmul.f32 %v1833, %v1843
      %v1862 = vmul.f32 %v1833, %v1847
      %v1863 = vmul.f32 %v1833, %v1851
      %v1864 = vadd.f32 %v1817, %v1856
      %v1865 = vadd.f32 %v1818, %v1857
      %v1866 = vadd.f32 %v1819, %v1858
      %v1867 = vadd.f32 %v1820, %v1859
      %v1868 = vadd.f32 %v1821, %v1860
      %v1869 = vadd.f32 %v1822, %v1861
      %v1870 = vadd.f32 %v1823, %v1862
      %v1871 = vadd.f32 %v1824, %v1863
      %1872 = vset.pattern.permute.xlu0 17
      %1873 = vperm.xlu0 %1872, %v891
      %v1874 = vpop.permute.xlu0 %1873
      %1876 = vset.pattern.permute.xlu0 17
      %1877 = vperm.xlu0 %1876, %v892
      %v1878 = vpop.permute.xlu0 %1877
      %v1880 = vmul.f32 %v1874, %v1839
      %v1881 = vmul.f32 %v1874, %v1843
      %v1882 = vmul.f32 %v1874, %v1847
      %v1883 = vmul.f32 %v1874, %v1851
      %v1884 = vmul.f32 %v1878, %v1839
      %v1885 = vmul.f32 %v1878, %v1843
      %v1886 = vmul.f32 %v1878, %v1847
      %v1887 = vmul.f32 %v1878, %v1851
      %1896 = vrot.lane.b32.xlu0 %v1880, 127
      %v1897 = vpop.permute.xlu0 %1896
      %1898 = vrot.lane.b32.xlu0 %v1881, 127
      %v1899 = vpop.permute.xlu0 %1898
      %1900 = vrot.lane.b32.xlu0 %v1882, 127
      %v1901 = vpop.permute.xlu0 %1900
      %1902 = vrot.lane.b32.xlu0 %v1883, 127
      %v1903 = vpop.permute.xlu0 %1902
      %1904 = vrot.lane.b32.xlu0 %v1884, 127
      %v1905 = vpop.permute.xlu0 %1904
      %1906 = vrot.lane.b32.xlu0 %v1885, 127
      %v1907 = vpop.permute.xlu0 %1906
      %1908 = vrot.lane.b32.xlu0 %v1886, 127
      %v1909 = vpop.permute.xlu0 %1908
      %1910 = vrot.lane.b32.xlu0 %v1887, 127
      %v1911 = vpop.permute.xlu0 %1910
      %v1912 = vsel %vm281, %v1897, %v1899
      %v1913 = vsel %vm281, %v1899, %v1901
      %v1914 = vsel %vm281, %v1901, %v1903
      %v1915 = vsel %vm281, %v1905, %v1907
      %v1916 = vsel %vm281, %v1907, %v1909
      %v1917 = vsel %vm281, %v1909, %v1911
      %v1926 = vadd.f32 %v1864, %v1912
      %v1927 = vadd.f32 %v1865, %v1913
      %v1928 = vadd.f32 %v1866, %v1914
      %v1929 = vadd.f32 %v1867, %v1903
      %v1930 = vadd.f32 %v1868, %v1915
      %v1931 = vadd.f32 %v1869, %v1916
      %v1932 = vadd.f32 %v1870, %v1917
      %v1933 = vadd.f32 %v1871, %v1911
      %1934 = vset.pattern.permute.xlu0 18
      %1935 = vperm.xlu0 %1934, %v891
      %v1936 = vpop.permute.xlu0 %1935
      %1938 = vset.pattern.permute.xlu0 18
      %1939 = vperm.xlu0 %1938, %v892
      %v1940 = vpop.permute.xlu0 %1939
      %v1942 = vmul.f32 %v1936, %v1839
      %v1943 = vmul.f32 %v1936, %v1843
      %v1944 = vmul.f32 %v1936, %v1847
      %v1945 = vmul.f32 %v1936, %v1851
      %v1946 = vmul.f32 %v1940, %v1839
      %v1947 = vmul.f32 %v1940, %v1843
      %v1948 = vmul.f32 %v1940, %v1847
      %v1949 = vmul.f32 %v1940, %v1851
      %1958 = vrot.lane.b32.xlu0 %v1942, 108
      %v1959 = vpop.permute.xlu0 %1958
      %1960 = vrot.lane.b32.xlu0 %v1943, 108
      %v1961 = vpop.permute.xlu0 %1960
      %1962 = vrot.lane.b32.xlu0 %v1944, 108
      %v1963 = vpop.permute.xlu0 %1962
      %1964 = vrot.lane.b32.xlu0 %v1945, 108
      %v1965 = vpop.permute.xlu0 %1964
      %1966 = vrot.lane.b32.xlu0 %v1946, 108
      %v1967 = vpop.permute.xlu0 %1966
      %1968 = vrot.lane.b32.xlu0 %v1947, 108
      %v1969 = vpop.permute.xlu0 %1968
      %1970 = vrot.lane.b32.xlu0 %v1948, 108
      %v1971 = vpop.permute.xlu0 %1970
      %1972 = vrot.lane.b32.xlu0 %v1949, 108
      %v1973 = vpop.permute.xlu0 %1972
      %v1974 = vsel %vm313, %v1959, %v1961
      %v1975 = vsel %vm313, %v1961, %v1963
      %v1976 = vsel %vm313, %v1963, %v1965
      %v1977 = vsel %vm313, %v1967, %v1969
      %v1978 = vsel %vm313, %v1969, %v1971
      %v1979 = vsel %vm313, %v1971, %v1973
      %v1988 = vadd.f32 %v1926, %v1974
      %v1989 = vadd.f32 %v1927, %v1975
      %v1990 = vadd.f32 %v1928, %v1976
      %v1991 = vadd.f32 %v1929, %v1965
      %v1992 = vadd.f32 %v1930, %v1977
      %v1993 = vadd.f32 %v1931, %v1978
      %v1994 = vadd.f32 %v1932, %v1979
      %v1995 = vadd.f32 %v1933, %v1973
      %1996 = vset.pattern.permute.xlu0 19
      %1997 = vperm.xlu0 %1996, %v891
      %v1998 = vpop.permute.xlu0 %1997
      %2000 = vset.pattern.permute.xlu0 19
      %2001 = vperm.xlu0 %2000, %v892
      %v2002 = vpop.permute.xlu0 %2001
      %v2004 = vmul.f32 %v1998, %v1839
      %v2005 = vmul.f32 %v1998, %v1843
      %v2006 = vmul.f32 %v1998, %v1847
      %v2007 = vmul.f32 %v1998, %v1851
      %v2008 = vmul.f32 %v2002, %v1839
      %v2009 = vmul.f32 %v2002, %v1843
      %v2010 = vmul.f32 %v2002, %v1847
      %v2011 = vmul.f32 %v2002, %v1851
      %2020 = vrot.lane.b32.xlu0 %v2004, 107
      %v2021 = vpop.permute.xlu0 %2020
      %2022 = vrot.lane.b32.xlu0 %v2005, 107
      %v2023 = vpop.permute.xlu0 %2022
      %2024 = vrot.lane.b32.xlu0 %v2006, 107
      %v2025 = vpop.permute.xlu0 %2024
      %2026 = vrot.lane.b32.xlu0 %v2007, 107
      %v2027 = vpop.permute.xlu0 %2026
      %2028 = vrot.lane.b32.xlu0 %v2008, 107
      %v2029 = vpop.permute.xlu0 %2028
      %2030 = vrot.lane.b32.xlu0 %v2009, 107
      %v2031 = vpop.permute.xlu0 %2030
      %2032 = vrot.lane.b32.xlu0 %v2010, 107
      %v2033 = vpop.permute.xlu0 %2032
      %2034 = vrot.lane.b32.xlu0 %v2011, 107
      %v2035 = vpop.permute.xlu0 %2034
      %v2036 = vsel %vm345, %v2021, %v2023
      %v2037 = vsel %vm345, %v2023, %v2025
      %v2038 = vsel %vm345, %v2025, %v2027
      %v2039 = vsel %vm345, %v2029, %v2031
      %v2040 = vsel %vm345, %v2031, %v2033
      %v2041 = vsel %vm345, %v2033, %v2035
      %v2050 = vadd.f32 %v1988, %v2036
      %v2051 = vadd.f32 %v1989, %v2037
      %v2052 = vadd.f32 %v1990, %v2038
      %v2053 = vadd.f32 %v1991, %v2027
      %v2054 = vadd.f32 %v1992, %v2039
      %v2055 = vadd.f32 %v1993, %v2040
      %v2056 = vadd.f32 %v1994, %v2041
      %v2057 = vadd.f32 %v1995, %v2035
      %s2058 = scalar_lea.vmem [#allocation2], 5
      %v2059 = vld [vmem:[%s2058] ss:$8 sm:$0xf]
      %2060 = vset.pattern.permute.xlu0 20
      %2061 = vperm.xlu0 %2060, %v891
      %v2062 = vpop.permute.xlu0 %2061
      %2064 = vset.pattern.permute.xlu0 20
      %2065 = vperm.xlu0 %2064, %v892
      %v2066 = vpop.permute.xlu0 %2065
      %v2069 = vlaneseq
      %v2070 = vshrl.u32 %v2069, 7
      %v2071 = vsub.s32 0, %v2070
      %v2072 = vrot.slane %v2059, %v2071
      %v2073 = vlaneseq
      %v2074 = vshrl.u32 %v2073, 7
      %v2075 = vsub.s32 1, %v2074
      %v2076 = vrot.slane %v2059, %v2075
      %v2077 = vlaneseq
      %v2078 = vshrl.u32 %v2077, 7
      %v2079 = vsub.s32 2, %v2078
      %v2080 = vrot.slane %v2059, %v2079
      %v2081 = vlaneseq
      %v2082 = vshrl.u32 %v2081, 7
      %v2083 = vsub.s32 3, %v2082
      %v2084 = vrot.slane %v2059, %v2083
      %v2089 = vmul.f32 %v2062, %v2072
      %v2090 = vmul.f32 %v2062, %v2076
      %v2091 = vmul.f32 %v2062, %v2080
      %v2092 = vmul.f32 %v2062, %v2084
      %v2093 = vmul.f32 %v2066, %v2072
      %v2094 = vmul.f32 %v2066, %v2076
      %v2095 = vmul.f32 %v2066, %v2080
      %v2096 = vmul.f32 %v2066, %v2084
      %v2097 = vadd.f32 %v2050, %v2089
      %v2098 = vadd.f32 %v2051, %v2090
      %v2099 = vadd.f32 %v2052, %v2091
      %v2100 = vadd.f32 %v2053, %v2092
      %v2101 = vadd.f32 %v2054, %v2093
      %v2102 = vadd.f32 %v2055, %v2094
      %v2103 = vadd.f32 %v2056, %v2095
      %v2104 = vadd.f32 %v2057, %v2096
      %2105 = vset.pattern.permute.xlu0 21
      %2106 = vperm.xlu0 %2105, %v891
      %v2107 = vpop.permute.xlu0 %2106
      %2109 = vset.pattern.permute.xlu0 21
      %2110 = vperm.xlu0 %2109, %v892
      %v2111 = vpop.permute.xlu0 %2110
      %v2113 = vmul.f32 %v2107, %v2072
      %v2114 = vmul.f32 %v2107, %v2076
      %v2115 = vmul.f32 %v2107, %v2080
      %v2116 = vmul.f32 %v2107, %v2084
      %v2117 = vmul.f32 %v2111, %v2072
      %v2118 = vmul.f32 %v2111, %v2076
      %v2119 = vmul.f32 %v2111, %v2080
      %v2120 = vmul.f32 %v2111, %v2084
      %2129 = vrot.lane.b32.xlu0 %v2113, 127
      %v2130 = vpop.permute.xlu0 %2129
      %2131 = vrot.lane.b32.xlu0 %v2114, 127
      %v2132 = vpop.permute.xlu0 %2131
      %2133 = vrot.lane.b32.xlu0 %v2115, 127
      %v2134 = vpop.permute.xlu0 %2133
      %2135 = vrot.lane.b32.xlu0 %v2116, 127
      %v2136 = vpop.permute.xlu0 %2135
      %2137 = vrot.lane.b32.xlu0 %v2117, 127
      %v2138 = vpop.permute.xlu0 %2137
      %2139 = vrot.lane.b32.xlu0 %v2118, 127
      %v2140 = vpop.permute.xlu0 %2139
      %2141 = vrot.lane.b32.xlu0 %v2119, 127
      %v2142 = vpop.permute.xlu0 %2141
      %2143 = vrot.lane.b32.xlu0 %v2120, 127
      %v2144 = vpop.permute.xlu0 %2143
      %v2145 = vsel %vm281, %v2130, %v2132
      %v2146 = vsel %vm281, %v2132, %v2134
      %v2147 = vsel %vm281, %v2134, %v2136
      %v2148 = vsel %vm281, %v2138, %v2140
      %v2149 = vsel %vm281, %v2140, %v2142
      %v2150 = vsel %vm281, %v2142, %v2144
      %v2159 = vadd.f32 %v2097, %v2145
      %v2160 = vadd.f32 %v2098, %v2146
      %v2161 = vadd.f32 %v2099, %v2147
      %v2162 = vadd.f32 %v2100, %v2136
      %v2163 = vadd.f32 %v2101, %v2148
      %v2164 = vadd.f32 %v2102, %v2149
      %v2165 = vadd.f32 %v2103, %v2150
      %v2166 = vadd.f32 %v2104, %v2144
      %2167 = vset.pattern.permute.xlu0 22
      %2168 = vperm.xlu0 %2167, %v891
      %v2169 = vpop.permute.xlu0 %2168
      %2171 = vset.pattern.permute.xlu0 22
      %2172 = vperm.xlu0 %2171, %v892
      %v2173 = vpop.permute.xlu0 %2172
      %v2175 = vmul.f32 %v2169, %v2072
      %v2176 = vmul.f32 %v2169, %v2076
      %v2177 = vmul.f32 %v2169, %v2080
      %v2178 = vmul.f32 %v2169, %v2084
      %v2179 = vmul.f32 %v2173, %v2072
      %v2180 = vmul.f32 %v2173, %v2076
      %v2181 = vmul.f32 %v2173, %v2080
      %v2182 = vmul.f32 %v2173, %v2084
      %2191 = vrot.lane.b32.xlu0 %v2175, 108
      %v2192 = vpop.permute.xlu0 %2191
      %2193 = vrot.lane.b32.xlu0 %v2176, 108
      %v2194 = vpop.permute.xlu0 %2193
      %2195 = vrot.lane.b32.xlu0 %v2177, 108
      %v2196 = vpop.permute.xlu0 %2195
      %2197 = vrot.lane.b32.xlu0 %v2178, 108
      %v2198 = vpop.permute.xlu0 %2197
      %2199 = vrot.lane.b32.xlu0 %v2179, 108
      %v2200 = vpop.permute.xlu0 %2199
      %2201 = vrot.lane.b32.xlu0 %v2180, 108
      %v2202 = vpop.permute.xlu0 %2201
      %2203 = vrot.lane.b32.xlu0 %v2181, 108
      %v2204 = vpop.permute.xlu0 %2203
      %2205 = vrot.lane.b32.xlu0 %v2182, 108
      %v2206 = vpop.permute.xlu0 %2205
      %v2207 = vsel %vm313, %v2192, %v2194
      %v2208 = vsel %vm313, %v2194, %v2196
      %v2209 = vsel %vm313, %v2196, %v2198
      %v2210 = vsel %vm313, %v2200, %v2202
      %v2211 = vsel %vm313, %v2202, %v2204
      %v2212 = vsel %vm313, %v2204, %v2206
      %v2221 = vadd.f32 %v2159, %v2207
      %v2222 = vadd.f32 %v2160, %v2208
      %v2223 = vadd.f32 %v2161, %v2209
      %v2224 = vadd.f32 %v2162, %v2198
      %v2225 = vadd.f32 %v2163, %v2210
      %v2226 = vadd.f32 %v2164, %v2211
      %v2227 = vadd.f32 %v2165, %v2212
      %v2228 = vadd.f32 %v2166, %v2206
      %2229 = vset.pattern.permute.xlu0 23
      %2230 = vperm.xlu0 %2229, %v891
      %v2231 = vpop.permute.xlu0 %2230
      %2233 = vset.pattern.permute.xlu0 23
      %2234 = vperm.xlu0 %2233, %v892
      %v2235 = vpop.permute.xlu0 %2234
      %v2237 = vmul.f32 %v2231, %v2072
      %v2238 = vmul.f32 %v2231, %v2076
      %v2239 = vmul.f32 %v2231, %v2080
      %v2240 = vmul.f32 %v2231, %v2084
      %v2241 = vmul.f32 %v2235, %v2072
      %v2242 = vmul.f32 %v2235, %v2076
      %v2243 = vmul.f32 %v2235, %v2080
      %v2244 = vmul.f32 %v2235, %v2084
      %2253 = vrot.lane.b32.xlu0 %v2237, 107
      %v2254 = vpop.permute.xlu0 %2253
      %2255 = vrot.lane.b32.xlu0 %v2238, 107
      %v2256 = vpop.permute.xlu0 %2255
      %2257 = vrot.lane.b32.xlu0 %v2239, 107
      %v2258 = vpop.permute.xlu0 %2257
      %2259 = vrot.lane.b32.xlu0 %v2240, 107
      %v2260 = vpop.permute.xlu0 %2259
      %2261 = vrot.lane.b32.xlu0 %v2241, 107
      %v2262 = vpop.permute.xlu0 %2261
      %2263 = vrot.lane.b32.xlu0 %v2242, 107
      %v2264 = vpop.permute.xlu0 %2263
      %2265 = vrot.lane.b32.xlu0 %v2243, 107
      %v2266 = vpop.permute.xlu0 %2265
      %2267 = vrot.lane.b32.xlu0 %v2244, 107
      %v2268 = vpop.permute.xlu0 %2267
      %v2269 = vsel %vm345, %v2254, %v2256
      %v2270 = vsel %vm345, %v2256, %v2258
      %v2271 = vsel %vm345, %v2258, %v2260
      %v2272 = vsel %vm345, %v2262, %v2264
      %v2273 = vsel %vm345, %v2264, %v2266
      %v2274 = vsel %vm345, %v2266, %v2268
      %v2283 = vadd.f32 %v2221, %v2269
      %v2284 = vadd.f32 %v2222, %v2270
      %v2285 = vadd.f32 %v2223, %v2271
      %v2286 = vadd.f32 %v2224, %v2260
      %v2287 = vadd.f32 %v2225, %v2272
      %v2288 = vadd.f32 %v2226, %v2273
      %v2289 = vadd.f32 %v2227, %v2274
      %v2290 = vadd.f32 %v2228, %v2268
      %s2291 = scalar_lea.vmem [#allocation2], 6
      %v2292 = vld [vmem:[%s2291] ss:$8 sm:$0xf]
      %2293 = vset.pattern.permute.xlu0 24
      %2294 = vperm.xlu0 %2293, %v891
      %v2295 = vpop.permute.xlu0 %2294
      %2297 = vset.pattern.permute.xlu0 24
      %2298 = vperm.xlu0 %2297, %v892
      %v2299 = vpop.permute.xlu0 %2298
      %v2302 = vlaneseq
      %v2303 = vshrl.u32 %v2302, 7
      %v2304 = vsub.s32 0, %v2303
      %v2305 = vrot.slane %v2292, %v2304
      %v2306 = vlaneseq
      %v2307 = vshrl.u32 %v2306, 7
      %v2308 = vsub.s32 1, %v2307
      %v2309 = vrot.slane %v2292, %v2308
      %v2310 = vlaneseq
      %v2311 = vshrl.u32 %v2310, 7
      %v2312 = vsub.s32 2, %v2311
      %v2313 = vrot.slane %v2292, %v2312
      %v2314 = vlaneseq
      %v2315 = vshrl.u32 %v2314, 7
      %v2316 = vsub.s32 3, %v2315
      %v2317 = vrot.slane %v2292, %v2316
      %v2322 = vmul.f32 %v2295, %v2305
      %v2323 = vmul.f32 %v2295, %v2309
      %v2324 = vmul.f32 %v2295, %v2313
      %v2325 = vmul.f32 %v2295, %v2317
      %v2326 = vmul.f32 %v2299, %v2305
      %v2327 = vmul.f32 %v2299, %v2309
      %v2328 = vmul.f32 %v2299, %v2313
      %v2329 = vmul.f32 %v2299, %v2317
      %v2330 = vadd.f32 %v2283, %v2322
      %v2331 = vadd.f32 %v2284, %v2323
      %v2332 = vadd.f32 %v2285, %v2324
      %v2333 = vadd.f32 %v2286, %v2325
      %v2334 = vadd.f32 %v2287, %v2326
      %v2335 = vadd.f32 %v2288, %v2327
      %v2336 = vadd.f32 %v2289, %v2328
      %v2337 = vadd.f32 %v2290, %v2329
      %2338 = vset.pattern.permute.xlu0 25
      %2339 = vperm.xlu0 %2338, %v891
      %v2340 = vpop.permute.xlu0 %2339
      %2342 = vset.pattern.permute.xlu0 25
      %2343 = vperm.xlu0 %2342, %v892
      %v2344 = vpop.permute.xlu0 %2343
      %v2346 = vmul.f32 %v2340, %v2305
      %v2347 = vmul.f32 %v2340, %v2309
      %v2348 = vmul.f32 %v2340, %v2313
      %v2349 = vmul.f32 %v2340, %v2317
      %v2350 = vmul.f32 %v2344, %v2305
      %v2351 = vmul.f32 %v2344, %v2309
      %v2352 = vmul.f32 %v2344, %v2313
      %v2353 = vmul.f32 %v2344, %v2317
      %2362 = vrot.lane.b32.xlu0 %v2346, 127
      %v2363 = vpop.permute.xlu0 %2362
      %2364 = vrot.lane.b32.xlu0 %v2347, 127
      %v2365 = vpop.permute.xlu0 %2364
      %2366 = vrot.lane.b32.xlu0 %v2348, 127
      %v2367 = vpop.permute.xlu0 %2366
      %2368 = vrot.lane.b32.xlu0 %v2349, 127
      %v2369 = vpop.permute.xlu0 %2368
      %2370 = vrot.lane.b32.xlu0 %v2350, 127
      %v2371 = vpop.permute.xlu0 %2370
      %2372 = vrot.lane.b32.xlu0 %v2351, 127
      %v2373 = vpop.permute.xlu0 %2372
      %2374 = vrot.lane.b32.xlu0 %v2352, 127
      %v2375 = vpop.permute.xlu0 %2374
      %2376 = vrot.lane.b32.xlu0 %v2353, 127
      %v2377 = vpop.permute.xlu0 %2376
      %v2378 = vsel %vm281, %v2363, %v2365
      %v2379 = vsel %vm281, %v2365, %v2367
      %v2380 = vsel %vm281, %v2367, %v2369
      %v2381 = vsel %vm281, %v2371, %v2373
      %v2382 = vsel %vm281, %v2373, %v2375
      %v2383 = vsel %vm281, %v2375, %v2377
      %v2392 = vadd.f32 %v2330, %v2378
      %v2393 = vadd.f32 %v2331, %v2379
      %v2394 = vadd.f32 %v2332, %v2380
      %v2395 = vadd.f32 %v2333, %v2369
      %v2396 = vadd.f32 %v2334, %v2381
      %v2397 = vadd.f32 %v2335, %v2382
      %v2398 = vadd.f32 %v2336, %v2383
      %v2399 = vadd.f32 %v2337, %v2377
      %2400 = vset.pattern.permute.xlu0 26
      %2401 = vperm.xlu0 %2400, %v891
      %v2402 = vpop.permute.xlu0 %2401
      %2404 = vset.pattern.permute.xlu0 26
      %2405 = vperm.xlu0 %2404, %v892
      %v2406 = vpop.permute.xlu0 %2405
      %v2408 = vmul.f32 %v2402, %v2305
      %v2409 = vmul.f32 %v2402, %v2309
      %v2410 = vmul.f32 %v2402, %v2313
      %v2411 = vmul.f32 %v2402, %v2317
      %v2412 = vmul.f32 %v2406, %v2305
      %v2413 = vmul.f32 %v2406, %v2309
      %v2414 = vmul.f32 %v2406, %v2313
      %v2415 = vmul.f32 %v2406, %v2317
      %2424 = vrot.lane.b32.xlu0 %v2408, 108
      %v2425 = vpop.permute.xlu0 %2424
      %2426 = vrot.lane.b32.xlu0 %v2409, 108
      %v2427 = vpop.permute.xlu0 %2426
      %2428 = vrot.lane.b32.xlu0 %v2410, 108
      %v2429 = vpop.permute.xlu0 %2428
      %2430 = vrot.lane.b32.xlu0 %v2411, 108
      %v2431 = vpop.permute.xlu0 %2430
      %2432 = vrot.lane.b32.xlu0 %v2412, 108
      %v2433 = vpop.permute.xlu0 %2432
      %2434 = vrot.lane.b32.xlu0 %v2413, 108
      %v2435 = vpop.permute.xlu0 %2434
      %2436 = vrot.lane.b32.xlu0 %v2414, 108
      %v2437 = vpop.permute.xlu0 %2436
      %2438 = vrot.lane.b32.xlu0 %v2415, 108
      %v2439 = vpop.permute.xlu0 %2438
      %v2440 = vsel %vm313, %v2425, %v2427
      %v2441 = vsel %vm313, %v2427, %v2429
      %v2442 = vsel %vm313, %v2429, %v2431
      %v2443 = vsel %vm313, %v2433, %v2435
      %v2444 = vsel %vm313, %v2435, %v2437
      %v2445 = vsel %vm313, %v2437, %v2439
      %v2454 = vadd.f32 %v2392, %v2440
      %v2455 = vadd.f32 %v2393, %v2441
      %v2456 = vadd.f32 %v2394, %v2442
      %v2457 = vadd.f32 %v2395, %v2431
      %v2458 = vadd.f32 %v2396, %v2443
      %v2459 = vadd.f32 %v2397, %v2444
      %v2460 = vadd.f32 %v2398, %v2445
      %v2461 = vadd.f32 %v2399, %v2439
      %2462 = vset.pattern.permute.xlu0 27
      %2463 = vperm.xlu0 %2462, %v891
      %v2464 = vpop.permute.xlu0 %2463
      %2466 = vset.pattern.permute.xlu0 27
      %2467 = vperm.xlu0 %2466, %v892
      %v2468 = vpop.permute.xlu0 %2467
      %v2470 = vmul.f32 %v2464, %v2305
      %v2471 = vmul.f32 %v2464, %v2309
      %v2472 = vmul.f32 %v2464, %v2313
      %v2473 = vmul.f32 %v2464, %v2317
      %v2474 = vmul.f32 %v2468, %v2305
      %v2475 = vmul.f32 %v2468, %v2309
      %v2476 = vmul.f32 %v2468, %v2313
      %v2477 = vmul.f32 %v2468, %v2317
      %2486 = vrot.lane.b32.xlu0 %v2470, 107
      %v2487 = vpop.permute.xlu0 %2486
      %2488 = vrot.lane.b32.xlu0 %v2471, 107
      %v2489 = vpop.permute.xlu0 %2488
      %2490 = vrot.lane.b32.xlu0 %v2472, 107
      %v2491 = vpop.permute.xlu0 %2490
      %2492 = vrot.lane.b32.xlu0 %v2473, 107
      %v2493 = vpop.permute.xlu0 %2492
      %2494 = vrot.lane.b32.xlu0 %v2474, 107
      %v2495 = vpop.permute.xlu0 %2494
      %2496 = vrot.lane.b32.xlu0 %v2475, 107
      %v2497 = vpop.permute.xlu0 %2496
      %2498 = vrot.lane.b32.xlu0 %v2476, 107
      %v2499 = vpop.permute.xlu0 %2498
      %2500 = vrot.lane.b32.xlu0 %v2477, 107
      %v2501 = vpop.permute.xlu0 %2500
      %v2502 = vsel %vm345, %v2487, %v2489
      %v2503 = vsel %vm345, %v2489, %v2491
      %v2504 = vsel %vm345, %v2491, %v2493
      %v2505 = vsel %vm345, %v2495, %v2497
      %v2506 = vsel %vm345, %v2497, %v2499
      %v2507 = vsel %vm345, %v2499, %v2501
      %v2516 = vadd.f32 %v2454, %v2502
      %v2517 = vadd.f32 %v2455, %v2503
      %v2518 = vadd.f32 %v2456, %v2504
      %v2519 = vadd.f32 %v2457, %v2493
      %v2520 = vadd.f32 %v2458, %v2505
      %v2521 = vadd.f32 %v2459, %v2506
      %v2522 = vadd.f32 %v2460, %v2507
      %v2523 = vadd.f32 %v2461, %v2501
      %v2524 = vld [vmem:[%s4] sm:$0xff]
      %v2525 = vld [vmem:[%s4 + $0x8] sm:$0x1]
      %2527 = vset.pattern.permute.xlu0 0
      %2528 = vperm.xlu0 %2527, %v2524
      %v2529 = vpop.permute.xlu0 %2528
      %2532 = vset.pattern.permute.xlu0 0
      %2533 = vperm.xlu0 %2532, %v2525
      %v2534 = vpop.permute.xlu0 %2533
      %v2536 = vadd.f32 %v2516, %v2529
      %v2537 = vadd.f32 %v2517, %v2529
      %v2538 = vadd.f32 %v2518, %v2529
      %v2539 = vadd.f32 %v2519, %v2529
      %v2540 = vadd.f32 %v2520, %v2534
      %v2541 = vadd.f32 %v2521, %v2534
      %v2542 = vadd.f32 %v2522, %v2534
      %v2543 = vadd.f32 %v2523, %v2534
      %v2544 = vmax.f32 %v2536, 0.0
      %v2545 = vmax.f32 %v2537, 0.0
      %v2546 = vmax.f32 %v2538, 0.0
      %v2547 = vmax.f32 %v2539, 0.0
      %v2548 = vmax.f32 %v2540, 0.0
      %v2549 = vmax.f32 %v2541, 0.0
      %v2550 = vmax.f32 %v2542, 0.0
      %v2551 = vmax.f32 %v2543, 0.0
      %v2552 = vsub.f32 %v2544, 3.0
      %v2553 = vsub.f32 %v2545, 3.0
      %v2554 = vsub.f32 %v2546, 3.0
      %v2555 = vsub.f32 %v2547, 3.0
      %v2556 = vsub.f32 %v2548, 3.0
      %v2557 = vsub.f32 %v2549, 3.0
      %v2558 = vsub.f32 %v2550, 3.0
      %v2559 = vsub.f32 %v2551, 3.0
      %v2560 = vmax.f32 %v2552, 0.0
      %v2561 = vmax.f32 %v2553, 0.0
      %v2562 = vmax.f32 %v2554, 0.0
      %v2563 = vmax.f32 %v2555, 0.0
      %v2564 = vmax.f32 %v2556, 0.0
      %v2565 = vmax.f32 %v2557, 0.0
      %v2566 = vmax.f32 %v2558, 0.0
      %v2567 = vmax.f32 %v2559, 0.0
      %v2568 = vmin.f32 %v2560, 6.0
      %v2569 = vmin.f32 %v2561, 6.0
      %v2570 = vmin.f32 %v2562, 6.0
      %v2571 = vmin.f32 %v2563, 6.0
      %v2572 = vmin.f32 %v2564, 6.0
      %v2573 = vmin.f32 %v2565, 6.0
      %v2574 = vmin.f32 %v2566, 6.0
      %v2575 = vmin.f32 %v2567, 6.0
      %2576 = vst [vmem:[%s224] sm:$0xff] %v2568
      %2577 = vst [vmem:[%s224 + $0x8] sm:$0xff] %v2569
      %2578 = vst [vmem:[%s224 + $0x10] sm:$0xff] %v2570
      %vm2579 = vcmask 130048
      %2580 = vst.msk [vmem:[%s224 + $0x18] sm:$0xff] %vm2579, %v2571
      %2581 = vst [vmem:[%s224 + $0x20] sm:$0x1] %v2572
      %2582 = vst [vmem:[%s224 + $0x28] sm:$0x1] %v2573
      %2583 = vst [vmem:[%s224 + $0x30] sm:$0x1] %v2574
      %vm2584 = vcmask 122880
      %2585 = vst.msk [vmem:[%s224 + $0x38] sm:$0x1] %vm2584, %v2575
      %p2586 = scmp.lt.s32.totalorder %s16, 1
      %s2587 = scalar_select %p2586, %s16, 1
      %s2588 = smul.addr %s2587, 8
      %s2589 = smul.addr %s2588, 8
      %s2590 = scalar_lea.vmem %s5, %s2589
      // Predicated region
      $region41: #{model_forward.1} parent=39 // pred_check
        %p2591 = pneg %p144
      $region42: #{model_forward.1} parent=39 // pred_check_branch
        %2593 = sbr.rel (%p2591) target = $region44
      $region43: #{model_forward.1} parent=39 // pred_region
        _
      $region44: #{model_forward.1} parent=39 // pred_fallthru
        _
    $region40: #{model_forward.1} parent=5 // pred_fallthru
      _
    %p2594 = scmp.le.s32.totalorder 2, %s11
    // Predicated region
    $region45: #{model_forward.1} parent=5 // pred_check
      %p2595 = pneg %p2594
    $region46: #{model_forward.1} parent=5 // pred_check_branch
      %2597 = sbr.rel (%p2595) target = $region48
    $region47: #{model_forward.1} parent=5 // pred_region
      %s2598 = ssub.s32 %s11, 2
      // Predicated region
      $region49: #{model_forward.1} parent=47 // pred_check
        %p2599 = pneg %p150
      $region50: #{model_forward.1} parent=47 // pred_check_branch
        %2601 = sbr.rel (%p2599) target = $region52
      $region51: #{model_forward.1} parent=47 // pred_region
        %p2602 = scmp.lt.s32.totalorder %s17, 1
        %s2603 = scalar_select %p2602, %s17, 1
        %s2604 = smul.addr %s2603, 8
        %s2605 = smul.addr %s2604, 8
        %s2606 = scalar_lea.vmem %s5, %s2605
      $region52: #{model_forward.1} parent=47 // pred_fallthru
        _
    $region48: #{model_forward.1} parent=5 // pred_fallthru
      _
  $region6: #{model_forward.1} parent=0 // loop_footer
    %s15 = sadd.s32 1, %s11
  $region7: #{model_forward.1} parent=0 // loop_footer_branch
    %10 = sbr.rel target = $region3
  $region8: #{model_forward.1} parent=0 // loop_exit
    _

</llo_original>
